<compile_context>
chip_gen: v5e
topology: v5e:2x2
jax: 0.10.0
libtpu: 0.0.40
codegen_flags: <defaults>
</compile_context>

<pallas_src>
import jax
import jax.numpy as jnp
from jax.experimental import pallas as pl
from jax.experimental.pallas import tpu as pltpu

C = 384          # fixed by the module (Conv2d(384, 384, 1))
BN_EPS = 1e-5
MAX_HW_TILE = 2048
VMEM_LIMIT = 32 * 1024 * 1024


# ----------------------------------------------------------------------------
# Pass 1: per-(image, split), per-channel partial sums of relu(W @ x).
# Lane-dense accumulation: stats[:, 0:128] holds 128 partial sums per channel,
# stats[:, 128:256] holds 128 partial sums of squares.  The conv output is NOT
# written to HBM here (stats-only pass).
# ----------------------------------------------------------------------------
def _conv_relu_stats_kernel(x_ref, w_ref, stats_ref):
    j = pl.program_id(2)

    # 1x1 conv == (C, C) @ (C, hw_tile) on the MXU (bf16 in, f32 accumulate),
    # then ReLU on the VPU.
    y = jnp.dot(w_ref[...], x_ref[...].astype(jnp.bfloat16),
                preferred_element_type=jnp.float32)
    y = jnp.maximum(y, 0.0)

    # Unrolled 128-lane-wide VPU adds; no cross-lane XLU reduction here.
    n_chunks = y.shape[1] // 128
    s = y[:, 0:128]
    sq = s * s
    for i in range(1, n_chunks):
        c = y[:, i * 128:(i + 1) * 128]
        s = s + c
        sq = sq + c * c

    @pl.when(j == 0)
    def _():
        stats_ref[...] = jnp.zeros_like(stats_ref)

    # 128-wide, lane-aligned accumulating stores (unmasked vst).
    stats_ref[:, 0:128] += s
    stats_ref[:, 128:256] += sq


# ----------------------------------------------------------------------------
# Pass 2: recompute y = relu(W @ x) and apply the fused BN affine
#         out = y * scale + shift  (scale/shift packed as one (C, 2) input).
# ----------------------------------------------------------------------------
def _conv_relu_bn_kernel(x_ref, w_ref, ss_ref, o_ref):
    y = jnp.dot(w_ref[...], x_ref[...].astype(jnp.bfloat16),
                preferred_element_type=jnp.float32)
    y = jnp.maximum(y, 0.0)
    scale = ss_ref[:, 0:1]          # (C, 1), broadcasts along lanes
    shift = ss_ref[:, 1:2]
    o_ref[...] = (y * scale + shift).astype(o_ref.dtype)


def _ceil_to(v, m):
    return pl.cdiv(v, m) * m


def layer9_forward(x_nchw, conv_w, gamma, beta):
    """Forward pass of layer9 (training-mode BatchNorm).

    x_nchw : (N, 384, H, W) float32
    conv_w : (384, 384, 1, 1) float32  (PyTorch OIHW conv weight)
    gamma, beta : (384,) float32       (BatchNorm affine params)
    Returns (N, 384, H, W) float32.
    """
    N, Cin, H, W = x_nchw.shape
    assert Cin == C
    HW = H * W
    M = N * HW                       # true element count per channel (for BN)

    x = x_nchw.reshape(N, C, HW).astype(jnp.float32)   # NCHW view, no transpose
    w = conv_w.reshape(C, C).astype(jnp.bfloat16)      # bf16 weights, f32 acc

    # ---- Tiling policy: multiple-of-128 tiles <= 2048, padded HW axis -------
    num_tiles_raw = pl.cdiv(HW, MAX_HW_TILE)
    S = 2 if num_tiles_raw >= 2 else 1     # megacore split of the stats pass
    tiles_per_split = pl.cdiv(num_tiles_raw, S)
    num_tiles = tiles_per_split * S
    hw_tile = _ceil_to(pl.cdiv(HW, num_tiles), 128)
    HW_pad = num_tiles * hw_tile
    if HW_pad != HW:
        # Zero padding is stats-safe: relu(W @ 0) == 0 contributes nothing to
        # the sums; we divide by the true M below.
        x = jnp.pad(x, ((0, 0), (0, 0), (0, HW_pad - HW)))

    # ---- Pass 1: per-(image, split) conv+relu statistics (no y writeback) ---
    stats = pl.pallas_call(
        _conv_relu_stats_kernel,
        out_shape=jax.ShapeDtypeStruct((N, S, C, 256), jnp.float32),
        grid_spec=pltpu.PrefetchScalarGridSpec(
            num_scalar_prefetch=0,
            grid=(N, S, tiles_per_split),
            in_specs=[
                pl.BlockSpec((None, C, hw_tile),
                             lambda n, s, j: (n, 0, s * tiles_per_split + j)),
                pl.BlockSpec((C, C), lambda n, s, j: (0, 0)),
            ],
            # Per-(n, split) accumulator slab: resident across j only, so both
            # n and s can be 'parallel' (both v7x TCs busy even at N=1).
            out_specs=pl.BlockSpec((None, None, C, 256),
                                   lambda n, s, j: (n, s, 0, 0)),
        ),
        compiler_params=pltpu.CompilerParams(
            dimension_semantics=("parallel", "parallel", "arbitrary"),
            vmem_limit_bytes=VMEM_LIMIT),
    )(x, w)

    # ---- BatchNorm statistics (training mode: biased variance) --------------
    # Tiny XLA epilogue (128->1 lane reduction + scale/shift).  Left outside
    # the kernel on purpose: folding it into pass 2 is a micro-win only in the
    # microsecond regime (low priority per review).
    total = jnp.sum(stats, axis=(0, 1))                    # (C, 256)
    sum_y = jnp.sum(total[:, :128], axis=1)                # (C,)
    sum_y2 = jnp.sum(total[:, 128:], axis=1)               # (C,)
    mean = sum_y / M
    var = sum_y2 / M - mean * mean                         # biased (training)
    inv_std = jax.lax.rsqrt(var + BN_EPS)
    scale = gamma.astype(jnp.float32) * inv_std
    shift = beta.astype(jnp.float32) - mean * scale
    scale_shift = jnp.stack([scale, shift], axis=1)        # (C, 2) fused consts
    # TODO(synk): BatchNorm running_mean/running_var (momentum) buffer updates
    # are module state (not part of the returned tensor) and are not emitted.

    # ---- Pass 2: recompute conv+relu and apply the BN affine ----------------
    out = pl.pallas_call(
        _conv_relu_bn_kernel,
        out_shape=jax.ShapeDtypeStruct((N, C, HW_pad), jnp.float32),
        grid_spec=pltpu.PrefetchScalarGridSpec(
            num_scalar_prefetch=0,
            grid=(N, num_tiles),
            in_specs=[
                pl.BlockSpec((None, C, hw_tile), lambda n, j: (n, 0, j)),
                pl.BlockSpec((C, C), lambda n, j: (0, 0)),
                pl.BlockSpec((C, 2), lambda n, j: (0, 0)),
            ],
            out_specs=pl.BlockSpec((None, C, hw_tile), lambda n, j: (n, 0, j)),
        ),
        compiler_params=pltpu.CompilerParams(
            dimension_semantics=("parallel", "parallel"),
            vmem_limit_bytes=VMEM_LIMIT),
    )(x, w, scale_shift)

    if HW_pad != HW:
        out = out[:, :, :HW]
    return out.reshape(N, C, H, W)


def _reference_forward(x_nchw, conv_w, gamma, beta, matmul_dtype=jnp.float32):
    """Pure-JAX reference mirroring the PyTorch semantics.

    matmul_dtype=bfloat16 gives a reference matched to the kernel's MXU
    precision contract (f32 accumulation either way)."""
    N, _, H, W = x_nchw.shape
    x = x_nchw.reshape(N, C, H * W)
    w = conv_w.reshape(C, C)
    y = jnp.einsum("oi,nip->nop",
                   w.astype(matmul_dtype), x.astype(matmul_dtype),
                   preferred_element_type=jnp.float32)
    y = jnp.maximum(y, 0.0)
    mean = jnp.mean(y, axis=(0, 2))
    var = jnp.mean((y - mean[None, :, None]) ** 2, axis=(0, 2))  # biased
    y = (y - mean[None, :, None]) * jax.lax.rsqrt(var + BN_EPS)[None, :, None]
    y = y * gamma[None, :, None] + beta[None, :, None]
    return y.reshape(N, C, H, W)


if __name__ == "__main__":
    key = jax.random.PRNGKey(0)
    k_x, k_w, k_g, k_b, k_x2 = jax.random.split(key, 5)

    # Deterministic synthetic parameters (shapes from the module's __init__).
    conv_w = 0.05 * jax.random.normal(k_w, (C, C, 1, 1), dtype=jnp.float32)
    gamma = 1.0 + 0.1 * jax.random.normal(k_g, (C,), dtype=jnp.float32)
    beta = 0.05 * jax.random.normal(k_b, (C,), dtype=jnp.float32)

    # Case 1: module-consistent small shape (single tile, no padding).
    x1 = jax.random.normal(k_x, (2, C, 16, 16), dtype=jnp.float32)
    out1 = jax.block_until_ready(layer9_forward(x1, conv_w, gamma, beta))
    ref1_bf16 = _reference_forward(x1, conv_w, gamma, beta,
                                   matmul_dtype=jnp.bfloat16)
    ref1_f32 = _reference_forward(x1, conv_w, gamma, beta)
    assert out1.shape == x1.shape
    assert jnp.allclose(out1, ref1_bf16, atol=1e-3, rtol=1e-3)   # matched precision
    assert jnp.allclose(out1, ref1_f32, atol=4e-2, rtol=1e-2)    # vs pure f32

    # Case 2: exercises multi-tile grid, the 2-way megacore split of the stats
    # pass, and zero padding of a ragged H*W (47*47 = 2209 -> padded to 2304).
    x2 = jax.random.normal(k_x2, (1, C, 47, 47), dtype=jnp.float32)
    out2 = jax.block_until_ready(layer9_forward(x2, conv_w, gamma, beta))
    ref2_bf16 = _reference_forward(x2, conv_w, gamma, beta,
                                   matmul_dtype=jnp.bfloat16)
    assert out2.shape == x2.shape
    assert jnp.allclose(out2, ref2_bf16, atol=1e-3, rtol=1e-3)

    print("KERNEL_OK")
</pallas_src>

<mosaic_0001>
module attributes {stable_mosaic.version = 11 : i64} {
  func.func @_conv_relu_stats_kernel(%arg0: i32, %arg1: i32, %arg2: i32, %arg3: memref<1x384x256xf32, #tpu.memory_space<vmem>>, %arg4: memref<384x384xbf16, #tpu.memory_space<vmem>>, %arg5: memref<1x1x384x256xf32, #tpu.memory_space<vmem>>) attributes {dimension_semantics = [#tpu.dimension_semantics<parallel>, #tpu.dimension_semantics<parallel>, #tpu.dimension_semantics<arbitrary>], iteration_bounds = array<i64: 2, 1, 1>, scalar_prefetch = 0 : i64, scratch_operands = 0 : i64, tpu.core_type = #tpu.core_type<tc>, window_params = [{transform_indices = @transform_0, window_bounds = array<i64: 1, 384, 256>}, {pipeline_mode = #tpu.pipeline_mode<synchronous>, transform_indices = @transform_1, window_bounds = array<i64: 384, 384>}, {transform_indices = @transform_2, window_bounds = array<i64: 1, 1, 384, 256>}]} {
    %c0 = arith.constant 0 : index
    %c0_0 = arith.constant 0 : index
    %0 = vector.load %arg4[%c0, %c0_0] : memref<384x384xbf16, #tpu.memory_space<vmem>>, vector<384x384xbf16>
    %c0_1 = arith.constant 0 : index
    %c0_2 = arith.constant 0 : index
    %c0_3 = arith.constant 0 : index
    %1 = vector.load %arg3[%c0_1, %c0_2, %c0_3] : memref<1x384x256xf32, #tpu.memory_space<vmem>>, vector<1x384x256xf32>
    %2 = vector.shape_cast %1 : vector<1x384x256xf32> to vector<384x256xf32>
    %3 = arith.truncf %2 : vector<384x256xf32> to vector<384x256xbf16>
    %cst = arith.constant dense<0.000000e+00> : vector<384x256xf32>
    %4 = tpu.matmul %0, %3, %cst {dimension_numbers = #tpu.dot_dimension_numbers<[1], [0], [0], [1], [0, 0, 1, 1], [], []>} : vector<384x384xbf16>, vector<384x256xbf16>, vector<384x256xf32> -> vector<384x256xf32>
    %cst_4 = arith.constant 0.000000e+00 : f32
    %5 = vector.broadcast %cst_4 : f32 to vector<384x256xf32>
    %6 = arith.maximumf %4, %5 : vector<384x256xf32>
    %7 = vector.extract_strided_slice %6 {offsets = [0, 0], sizes = [384, 128], strides = [1, 1]} : vector<384x256xf32> to vector<384x128xf32>
    %8 = arith.mulf %7, %7 : vector<384x128xf32>
    %9 = vector.extract_strided_slice %6 {offsets = [0, 128], sizes = [384, 128], strides = [1, 1]} : vector<384x256xf32> to vector<384x128xf32>
    %10 = arith.addf %7, %9 : vector<384x128xf32>
    %11 = arith.mulf %9, %9 : vector<384x128xf32>
    %12 = arith.addf %8, %11 : vector<384x128xf32>
    %c0_i32 = arith.constant 0 : i32
    %13 = arith.cmpi eq, %arg2, %c0_i32 : i32
    %14 = arith.extui %13 : i1 to i32
    %c0_i32_5 = arith.constant 0 : i32
    %15 = arith.cmpi ne, %14, %c0_i32_5 : i32
    scf.if %15 {
      %cst_21 = arith.constant 0.000000e+00 : f32
      %28 = vector.broadcast %cst_21 : f32 to vector<384x256xf32>
      %c0_22 = arith.constant 0 : index
      %c0_23 = arith.constant 0 : index
      %c0_24 = arith.constant 0 : index
      %c0_25 = arith.constant 0 : index
      %29 = vector.load %arg5[%c0_22, %c0_23, %c0_24, %c0_25] : memref<1x1x384x256xf32, #tpu.memory_space<vmem>>, vector<1x1x384x256xf32>
      %30 = vector.shape_cast %29 : vector<1x1x384x256xf32> to vector<384x256xf32>
      %31 = vector.shape_cast %28 : vector<384x256xf32> to vector<1x1x384x256xf32>
      tpu.vector_store %arg5[%c0_22, %c0_23, %c0_24, %c0_25], %31 {strides = array<i32>} : memref<1x1x384x256xf32, #tpu.memory_space<vmem>>, vector<1x1x384x256xf32>,
    } else {
    }
    %c0_6 = arith.constant 0 : index
    %c0_7 = arith.constant 0 : index
    %c0_8 = arith.constant 0 : index
    %c0_9 = arith.constant 0 : index
    %16 = vector.load %arg5[%c0_6, %c0_7, %c0_8, %c0_9] : memref<1x1x384x256xf32, #tpu.memory_space<vmem>>, vector<1x1x384x128xf32>
    %17 = vector.shape_cast %16 : vector<1x1x384x128xf32> to vector<384x128xf32>
    %18 = arith.addf %17, %10 : vector<384x128xf32>
    %c0_10 = arith.constant 0 : index
    %c0_11 = arith.constant 0 : index
    %c0_12 = arith.constant 0 : index
    %c0_13 = arith.constant 0 : index
    %19 = vector.load %arg5[%c0_10, %c0_11, %c0_12, %c0_13] : memref<1x1x384x256xf32, #tpu.memory_space<vmem>>, vector<1x1x384x128xf32>
    %20 = vector.shape_cast %19 : vector<1x1x384x128xf32> to vector<384x128xf32>
    %21 = vector.shape_cast %18 : vector<384x128xf32> to vector<1x1x384x128xf32>
    tpu.vector_store %arg5[%c0_10, %c0_11, %c0_12, %c0_13], %21 {strides = array<i32>} : memref<1x1x384x256xf32, #tpu.memory_space<vmem>>, vector<1x1x384x128xf32>,
    %c0_14 = arith.constant 0 : index
    %c0_15 = arith.constant 0 : index
    %c0_16 = arith.constant 0 : index
    %c128 = arith.constant 128 : index
    %22 = vector.load %arg5[%c0_14, %c0_15, %c0_16, %c128] : memref<1x1x384x256xf32, #tpu.memory_space<vmem>>, vector<1x1x384x128xf32>
    %23 = vector.shape_cast %22 : vector<1x1x384x128xf32> to vector<384x128xf32>
    %24 = arith.addf %23, %12 : vector<384x128xf32>
    %c0_17 = arith.constant 0 : index
    %c0_18 = arith.constant 0 : index
    %c0_19 = arith.constant 0 : index
    %c128_20 = arith.constant 128 : index
    %25 = vector.load %arg5[%c0_17, %c0_18, %c0_19, %c128_20] : memref<1x1x384x256xf32, #tpu.memory_space<vmem>>, vector<1x1x384x128xf32>
    %26 = vector.shape_cast %25 : vector<1x1x384x128xf32> to vector<384x128xf32>
    %27 = vector.shape_cast %24 : vector<384x128xf32> to vector<1x1x384x128xf32>
    tpu.vector_store %arg5[%c0_17, %c0_18, %c0_19, %c128_20], %27 {strides = array<i32>} : memref<1x1x384x256xf32, #tpu.memory_space<vmem>>, vector<1x1x384x128xf32>,
    return
  }
  func.func @transform_0(%arg0: i32, %arg1: i32, %arg2: i32) -> (i32, i32, i32) {
    %c1_i32 = arith.constant 1 : i32
    %0 = arith.muli %arg1, %c1_i32 : i32
    %1 = arith.addi %0, %arg2 : i32
    %c0_i32 = arith.constant 0 : i32
    %c0_i32_0 = arith.constant 0 : i32
    return %arg0, %c0_i32, %1 : i32, i32, i32
  }
  func.func @transform_1(%arg0: i32, %arg1: i32, %arg2: i32) -> (i32, i32) {
    %c0_i32 = arith.constant 0 : i32
    %c0_i32_0 = arith.constant 0 : i32
    %c0_i32_1 = arith.constant 0 : i32
    return %c0_i32, %c0_i32_0 : i32, i32
  }
  func.func @transform_2(%arg0: i32, %arg1: i32, %arg2: i32) -> (i32, i32, i32, i32) {
    %c0_i32 = arith.constant 0 : i32
    %c0_i32_0 = arith.constant 0 : i32
    %c0_i32_1 = arith.constant 0 : i32
    return %arg0, %arg1, %c0_i32, %c0_i32_0 : i32, i32, i32, i32
  }
}

</mosaic_0001>

<llo_original>
// kernel: tpu_custom_call.1
$region0: #{tpu_custom_call.1}
  #allocation0 [shape = 'u32[]', space=smem, size = 0x4, offset = 0x4, fixed_abs, tag = 'smem constant byte address 0x4 - core index']
  #allocation1 [shape = 'u32[72,128]{1,0:T(1,128)}', space=vmem, size = 0x9000, scoped, tag = 'internal scratch']
  %s0 = inlined_call_operand.hbm [shape: f32[2,384,256], index: 0, kind: input, shape index: {}]
  %s1 = inlined_call_operand.hbm [shape: bf16[384,384], index: 1, kind: input, shape index: {}]
  %s2 = inlined_call_operand.hbm [shape: f32[2,1,384,256], index: 2, kind: output, shape index: {}]
  %s3 = sld [smem:[#allocation0]]
  $region53: #{tpu_custom_call.1} parent=0
    _
  %s5 = ssub.s32 1, %s3
  %s6 = scalar_select 0, %s5, %s3
  $region1: #{tpu_custom_call.1} parent=0
    #allocation2 [shape = 'u8[786432]{0}', space=vmem, size = 0xc0000, scoped, tag = 'input window, operand 0']
    #allocation3 [shape = 's32[2]{0}', space=sflag, size = 0x8, scoped, tag = 'scoped memory for tpu_custom_call.1']
    #allocation4 [shape = 's32[2]{0}', space=sflag, size = 0x8, scoped, tag = 'scoped memory for tpu_custom_call.1']
    #allocation5 [shape = 'u8[294912]{0}', space=vmem, size = 0x48000, scoped, tag = 'input window, operand 1, single buffered']
    #allocation6 [shape = 's32[1]{0}', space=sflag, size = 0x4, scoped, tag = 'scoped memory for tpu_custom_call.1']
    #allocation7 [shape = 'u8[786432]{0}', space=vmem, size = 0xc0000, scoped, tag = 'output window, operand 0']
    %7 = vsyncpa [#allocation3], 0
    %s8 = scalar_lea.sflag [#allocation3], 1
    %9 = vsyncpa %s8, 0
    %10 = vsyncpa [#allocation6], 0
    %11 = vsyncpa [#allocation4], 0
    %s12 = scalar_lea.sflag [#allocation4], 1
    %13 = vsyncpa %s12, 0
    loop: start=0, step=1, limit=4
    $region2: #{tpu_custom_call.1} parent=1 // loop_pre_header
      _
    $region3: #{tpu_custom_call.1} parent=1 // loop_header
      %s15 = sphi 0, %s19
      %p16 = scmp.ge.s32.totalorder %s15, 4
      %s22 = sphi 0, %s41
      %s23 = sphi 0, %s37
      %s24 = sphi 0, %s33
      %s25 = sphi 0, %s22
      %s26 = sphi 0, %s23
      %s27 = sphi 0, %s24
      %s28 = sphi 0, %s25
      %s29 = sphi 0, %s26
      %s30 = sphi 0, %s27
      %s48 = sphi 0, %s50
      %s51 = sphi 0, %s48
      %s52 = sphi 0, %s51
      %s68 = sphi 0, %s52
      %s72 = sphi 0, %s72
      %s74 = sphi 0, %s72
      %s75 = sphi 0, %s74
      %s89 = sphi 0, %s75
      %s97 = sphi 0, %s99
      %s100 = sphi 0, %s97
      %s101 = sphi 0, %s100
      %s117 = sphi 0, %s101
    $region4: #{tpu_custom_call.1} parent=1 // loop_header_branch
      %18 = sbr.rel (%p16) target = $region8
    $region5: #{tpu_custom_call.1} parent=1 // loop_body
      %s20 = ssub.s32 %s15, 1
      %s21 = ssub.s32 %s15, 2
      %s31 = sadd.s32 1, %s24
      %p32 = scmp.ge.s32.totalorder %s31, 1
      %s33 = scalar_select %p32, 0, %s31
      %s34 = sadd.s32 1, %s23
      %s35 = scalar_select %p32, %s34, %s23
      %p36 = scmp.ge.s32.totalorder %s35, 1
      %s37 = scalar_select %p36, 0, %s35
      %s38 = sadd.s32 1, %s22
      %s39 = scalar_select %p36, %s38, %s22
      %p40 = scmp.ge.s32.totalorder %s39, 2
      %s41 = scalar_select %p40, 0, %s39
      %s42 = sadd.s32 %s23, %s24
      %s43 = sadd.s32 %s37, %s33
      %s44 = ssub.s32 %s22, %s41
      %s45 = ssub.s32 %s42, %s43
      %s46 = sor.u32 %s44, %s45
      %p47 = scmp.eq.s32.totalorder %s46, 0
      %s49 = sadd.s32 %s48, 1
      %s50 = scalar_select %p47, %s48, %s49
      %p53 = pneg %p47
      %p54 = scmp.eq.s32.totalorder %s15, 1
      %p55 = por %p53, %p54
      %p56 = scmp.ne.s32.totalorder %s48, %s51
      %p57 = scmp.eq.s32.totalorder %s15, 0
      %p58 = por %p56, %p57
      %p59 = scmp.ne.s32.totalorder %s48, %s51
      %p60 = scmp.eq.s32.totalorder %s20, 1
      %p61 = por %p59, %p60
      %p62 = scmp.ne.s32.totalorder %s51, %s52
      %p63 = scmp.eq.s32.totalorder %s20, 0
      %p64 = por %p62, %p63
      %p65 = scmp.ne.s32.totalorder %s51, %s52
      %p66 = scmp.eq.s32.totalorder %s21, 1
      %p67 = por %p65, %p66
      %p69 = scmp.ne.s32.totalorder %s52, %s68
      %p70 = scmp.eq.s32.totalorder %s21, 0
      %p71 = por %p69, %p70
      %s73 = sadd.s32 %s72, 1
      %p76 = scmp.eq.s32.totalorder %s15, 1
      %p77 = scmp.ne.s32.totalorder %s72, %s74
      %p78 = scmp.eq.s32.totalorder %s15, 0
      %p79 = por %p77, %p78
      %p80 = scmp.ne.s32.totalorder %s72, %s74
      %p81 = scmp.eq.s32.totalorder %s20, 1
      %p82 = por %p80, %p81
      %p83 = scmp.ne.s32.totalorder %s74, %s75
      %p84 = scmp.eq.s32.totalorder %s20, 0
      %p85 = por %p83, %p84
      %p86 = scmp.ne.s32.totalorder %s74, %s75
      %p87 = scmp.eq.s32.totalorder %s21, 1
      %p88 = por %p86, %p87
      %p90 = scmp.ne.s32.totalorder %s75, %s89
      %p91 = scmp.eq.s32.totalorder %s21, 0
      %p92 = por %p90, %p91
      %s93 = ssub.s32 %s22, %s41
      %s94 = ssub.s32 %s23, %s37
      %s95 = sor.u32 %s93, %s94
      %p96 = scmp.eq.s32.totalorder %s95, 0
      %s98 = sadd.s32 %s97, 1
      %s99 = scalar_select %p96, %s97, %s98
      %p102 = pneg %p96
      %p103 = scmp.eq.s32.totalorder %s15, 1
      %p104 = por %p102, %p103
      %p105 = scmp.ne.s32.totalorder %s97, %s100
      %p106 = scmp.eq.s32.totalorder %s15, 0
      %p107 = por %p105, %p106
      %p108 = scmp.ne.s32.totalorder %s97, %s100
      %p109 = scmp.eq.s32.totalorder %s20, 1
      %p110 = por %p108, %p109
      %p111 = scmp.ne.s32.totalorder %s100, %s101
      %p112 = scmp.eq.s32.totalorder %s20, 0
      %p113 = por %p111, %p112
      %p114 = scmp.ne.s32.totalorder %s100, %s101
      %p115 = scmp.eq.s32.totalorder %s21, 1
      %p116 = por %p114, %p115
      %p118 = scmp.ne.s32.totalorder %s101, %s117
      %p119 = scmp.eq.s32.totalorder %s21, 0
      %p120 = por %p118, %p119
      %p121 = scmp.le.s32.totalorder 1, %s15
      %p122 = scmp.lt.s32.totalorder %s15, 3
      %p123 = pnand %p121, %p122
      %p124 = pneg %p123
      // Predicated region
      $region9: #{tpu_custom_call.1} parent=5 // pred_check
        _
      $region10: #{tpu_custom_call.1} parent=5 // pred_check_branch
        %126 = sbr.rel (%p123) target = $region12
      $region11: #{tpu_custom_call.1} parent=5 // pred_region
        %s127 = ssub.s32 %s15, 1
        // Predicated region
        $region13: #{tpu_custom_call.1} parent=11 // pred_check
          %p128 = pneg %p85
        $region14: #{tpu_custom_call.1} parent=11 // pred_check_branch
          %130 = sbr.rel (%p128) target = $region16
        $region15: #{tpu_custom_call.1} parent=11 // pred_region
          %132 = vsyncadd [#allocation6], 0
          %s133 = sshll.u32 %s1, 4
          %s134 = int_to_ptr.hbm [resolvable:$true] %s133
          %s135 = sshll.u32 [#allocation5], 4
          %s136 = int_to_ptr.vmem [resolvable:$true] %s135
          %141 = dma.hbm_to_vmem [thread:$0]  %s134, 9216, %s136, [#allocation6], 192, 192, 12
        $region16: #{tpu_custom_call.1} parent=11 // pred_fallthru
          _
      $region12: #{tpu_custom_call.1} parent=5 // pred_fallthru
        _
      %p142 = scmp.lt.s32.totalorder %s15, 2
      // Predicated region
      $region17: #{tpu_custom_call.1} parent=5 // pred_check
        %p143 = pneg %p142
      $region18: #{tpu_custom_call.1} parent=5 // pred_check_branch
        %145 = sbr.rel (%p143) target = $region20
      $region19: #{tpu_custom_call.1} parent=5 // pred_region
        // Predicated region
        $region21: #{tpu_custom_call.1} parent=19 // pred_check
          %p146 = pneg %p58
        $region22: #{tpu_custom_call.1} parent=19 // pred_check_branch
          %148 = sbr.rel (%p146) target = $region24
        $region23: #{tpu_custom_call.1} parent=19 // pred_region
          %s149 = sand.u32 %s48, 1
          %s150 = scalar_lea.sflag [#allocation3], %s149
          %s151 = sand.u32 %s48, 1
          %s152 = smul.addr %s151, 768
          %s153 = scalar_lea.vmem [#allocation2], %s152
          %s154 = sadd.s32 %s23, %s24
          %s155 = smul.u32 2, %s154
          %157 = vsyncadd %s150, 0
          %s158 = smul.addr %s22, 96
          %s159 = sadd.s32 %s155, %s158
          %s160 = smul.addr %s159, 8
          %s161 = scalar_lea.hbm %s0, %s160
          %s162 = sshll.u32 %s161, 4
          %s163 = int_to_ptr.hbm [resolvable:$true] %s162
          %s164 = sshll.u32 %s153, 4
          %s165 = int_to_ptr.vmem [resolvable:$true] %s164
          %170 = dma.hbm_to_vmem [thread:$0]  %s163, 12288, %s165, %s150, 256, 256, 16
        $region24: #{tpu_custom_call.1} parent=19 // pred_fallthru
          _
      $region20: #{tpu_custom_call.1} parent=5 // pred_fallthru
        _
      %p171 = scmp.le.s32.totalorder 1, %s15
      %p172 = scmp.lt.s32.totalorder %s15, 3
      %p173 = pnand %p171, %p172
      %p174 = pneg %p173
      // Predicated region
      $region25: #{tpu_custom_call.1} parent=5 // pred_check
        _
      $region26: #{tpu_custom_call.1} parent=5 // pred_check_branch
        %176 = sbr.rel (%p173) target = $region28
      $region27: #{tpu_custom_call.1} parent=5 // pred_region
        %s177 = ssub.s32 %s15, 1
        %s178 = sand.u32 %s51, 1
        %s179 = scalar_lea.sflag [#allocation3], %s178
        %s180 = sand.u32 %s51, 1
        %s181 = smul.addr %s180, 768
        %s182 = scalar_lea.vmem [#allocation2], %s181
        // Predicated region
        $region29: #{tpu_custom_call.1} parent=27 // pred_check
          %p183 = pneg %p64
        $region30: #{tpu_custom_call.1} parent=27 // pred_check_branch
          %185 = sbr.rel (%p183) target = $region32
        $region31: #{tpu_custom_call.1} parent=27 // pred_region
          %187 = dma.done %s179, 12288
        $region32: #{tpu_custom_call.1} parent=27 // pred_fallthru
          _
        // Predicated region
        $region33: #{tpu_custom_call.1} parent=27 // pred_check
          %p188 = pneg %p85
        $region34: #{tpu_custom_call.1} parent=27 // pred_check_branch
          %190 = sbr.rel (%p188) target = $region36
        $region35: #{tpu_custom_call.1} parent=27 // pred_region
          %192 = dma.done [#allocation6], 9216
        $region36: #{tpu_custom_call.1} parent=27 // pred_fallthru
          _
        %s193 = sand.u32 %s51, 1
        %s194 = scalar_lea.sflag [#allocation3], %s193
        %s195 = sand.u32 %s51, 1
        %s196 = smul.addr %s195, 768
        %s197 = scalar_lea.vmem [#allocation2], %s196
        %p198 = pneg %p64
        %p199 = pneg %p61
        %p200 = pneg %p85
        %p201 = pneg %p82
        %p202 = pneg %p113
        %p203 = pneg %p110
        %s204 = sand.u32 %s100, 1
        %s205 = scalar_lea.sflag [#allocation4], %s204
        %s206 = sand.u32 %s100, 1
        %s207 = smul.addr %s206, 768
        %s208 = scalar_lea.vmem [#allocation7], %s207
        %s209 = sadd.s32 %s26, %s27
        %s210 = smul.u32 2, %s209
        %v211 = vld [vmem:[#allocation5] sm:$0xff]
        %v212 = vld [vmem:[#allocation5 + $0x8] sm:$0xf]
        %v213 = vld [vmem:[#allocation5 + $0xc] sm:$0xff]
        %v214 = vld [vmem:[#allocation5 + $0x14] sm:$0xf]
        %v215 = vld [vmem:[#allocation5 + $0x18] sm:$0xff]
        %v216 = vld [vmem:[#allocation5 + $0x20] sm:$0xf]
        %v217 = vld [vmem:[#allocation5 + $0x24] sm:$0xff]
        %v218 = vld [vmem:[#allocation5 + $0x2c] sm:$0xf]
        %v219 = vld [vmem:[#allocation5 + $0x30] sm:$0xff]
        %v220 = vld [vmem:[#allocation5 + $0x38] sm:$0xf]
        %v221 = vld [vmem:[#allocation5 + $0x3c] sm:$0xff]
        %v222 = vld [vmem:[#allocation5 + $0x44] sm:$0xf]
        %v223 = vld [vmem:[#allocation5 + $0x48] sm:$0xff]
        %v224 = vld [vmem:[#allocation5 + $0x50] sm:$0xf]
        %v225 = vld [vmem:[#allocation5 + $0x54] sm:$0xff]
        %v226 = vld [vmem:[#allocation5 + $0x5c] sm:$0xf]
        %v227 = vld [vmem:[#allocation5 + $0x60] sm:$0xff]
        %v228 = vld [vmem:[#allocation5 + $0x68] sm:$0xf]
        %v229 = vld [vmem:[#allocation5 + $0x6c] sm:$0xff]
        %v230 = vld [vmem:[#allocation5 + $0x74] sm:$0xf]
        %v231 = vld [vmem:[#allocation5 + $0x78] sm:$0xff]
        %v232 = vld [vmem:[#allocation5 + $0x80] sm:$0xf]
        %v233 = vld [vmem:[#allocation5 + $0x84] sm:$0xff]
        %v234 = vld [vmem:[#allocation5 + $0x8c] sm:$0xf]
        %v235 = vld [vmem:[#allocation5 + $0x90] sm:$0xff]
        %v236 = vld [vmem:[#allocation5 + $0x98] sm:$0xf]
        %v237 = vld [vmem:[#allocation5 + $0x9c] sm:$0xff]
        %v238 = vld [vmem:[#allocation5 + $0xa4] sm:$0xf]
        %v239 = vld [vmem:[#allocation5 + $0xa8] sm:$0xff]
        %v240 = vld [vmem:[#allocation5 + $0xb0] sm:$0xf]
        %v241 = vld [vmem:[#allocation5 + $0xb4] sm:$0xff]
        %v242 = vld [vmem:[#allocation5 + $0xbc] sm:$0xf]
        %v243 = vld [vmem:[#allocation5 + $0xc0] sm:$0xff]
        %v244 = vld [vmem:[#allocation5 + $0xc8] sm:$0xf]
        %v245 = vld [vmem:[#allocation5 + $0xcc] sm:$0xff]
        %v246 = vld [vmem:[#allocation5 + $0xd4] sm:$0xf]
        %v247 = vld [vmem:[#allocation5 + $0xd8] sm:$0xff]
        %v248 = vld [vmem:[#allocation5 + $0xe0] sm:$0xf]
        %v249 = vld [vmem:[#allocation5 + $0xe4] sm:$0xff]
        %v250 = vld [vmem:[#allocation5 + $0xec] sm:$0xf]
        %v251 = vld [vmem:[#allocation5 + $0xf0] sm:$0xff]
        %v252 = vld [vmem:[#allocation5 + $0xf8] sm:$0xf]
        %v253 = vld [vmem:[#allocation5 + $0xfc] sm:$0xff]
        %v254 = vld [vmem:[#allocation5 + $0x104] sm:$0xf]
        %v255 = vld [vmem:[#allocation5 + $0x108] sm:$0xff]
        %v256 = vld [vmem:[#allocation5 + $0x110] sm:$0xf]
        %v257 = vld [vmem:[#allocation5 + $0x114] sm:$0xff]
        %v258 = vld [vmem:[#allocation5 + $0x11c] sm:$0xf]
        %v259 = vld [vmem:[#allocation5 + $0x120] sm:$0xff]
        %v260 = vld [vmem:[#allocation5 + $0x128] sm:$0xf]
        %v261 = vld [vmem:[#allocation5 + $0x12c] sm:$0xff]
        %v262 = vld [vmem:[#allocation5 + $0x134] sm:$0xf]
        %v263 = vld [vmem:[#allocation5 + $0x138] sm:$0xff]
        %v264 = vld [vmem:[#allocation5 + $0x140] sm:$0xf]
        %v265 = vld [vmem:[#allocation5 + $0x144] sm:$0xff]
        %v266 = vld [vmem:[#allocation5 + $0x14c] sm:$0xf]
        %v267 = vld [vmem:[#allocation5 + $0x150] sm:$0xff]
        %v268 = vld [vmem:[#allocation5 + $0x158] sm:$0xf]
        %v269 = vld [vmem:[#allocation5 + $0x15c] sm:$0xff]
        %v270 = vld [vmem:[#allocation5 + $0x164] sm:$0xf]
        %v271 = vld [vmem:[#allocation5 + $0x168] sm:$0xff]
        %v272 = vld [vmem:[#allocation5 + $0x170] sm:$0xf]
        %v273 = vld [vmem:[#allocation5 + $0x174] sm:$0xff]
        %v274 = vld [vmem:[#allocation5 + $0x17c] sm:$0xf]
        %v275 = vld [vmem:[#allocation5 + $0x180] sm:$0xff]
        %v276 = vld [vmem:[#allocation5 + $0x188] sm:$0xf]
        %v277 = vld [vmem:[#allocation5 + $0x18c] sm:$0xff]
        %v278 = vld [vmem:[#allocation5 + $0x194] sm:$0xf]
        %v279 = vld [vmem:[#allocation5 + $0x198] sm:$0xff]
        %v280 = vld [vmem:[#allocation5 + $0x1a0] sm:$0xf]
        %v281 = vld [vmem:[#allocation5 + $0x1a4] sm:$0xff]
        %v282 = vld [vmem:[#allocation5 + $0x1ac] sm:$0xf]
        %v283 = vld [vmem:[#allocation5 + $0x1b0] sm:$0xff]
        %v284 = vld [vmem:[#allocation5 + $0x1b8] sm:$0xf]
        %v285 = vld [vmem:[#allocation5 + $0x1bc] sm:$0xff]
        %v286 = vld [vmem:[#allocation5 + $0x1c4] sm:$0xf]
        %v287 = vld [vmem:[#allocation5 + $0x1c8] sm:$0xff]
        %v288 = vld [vmem:[#allocation5 + $0x1d0] sm:$0xf]
        %v289 = vld [vmem:[#allocation5 + $0x1d4] sm:$0xff]
        %v290 = vld [vmem:[#allocation5 + $0x1dc] sm:$0xf]
        %v291 = vld [vmem:[#allocation5 + $0x1e0] sm:$0xff]
        %v292 = vld [vmem:[#allocation5 + $0x1e8] sm:$0xf]
        %v293 = vld [vmem:[#allocation5 + $0x1ec] sm:$0xff]
        %v294 = vld [vmem:[#allocation5 + $0x1f4] sm:$0xf]
        %v295 = vld [vmem:[#allocation5 + $0x1f8] sm:$0xff]
        %v296 = vld [vmem:[#allocation5 + $0x200] sm:$0xf]
        %v297 = vld [vmem:[#allocation5 + $0x204] sm:$0xff]
        %v298 = vld [vmem:[#allocation5 + $0x20c] sm:$0xf]
        %v299 = vld [vmem:[#allocation5 + $0x210] sm:$0xff]
        %v300 = vld [vmem:[#allocation5 + $0x218] sm:$0xf]
        %v301 = vld [vmem:[#allocation5 + $0x21c] sm:$0xff]
        %v302 = vld [vmem:[#allocation5 + $0x224] sm:$0xf]
        %v303 = vld [vmem:[#allocation5 + $0x228] sm:$0xff]
        %v304 = vld [vmem:[#allocation5 + $0x230] sm:$0xf]
        %v305 = vld [vmem:[#allocation5 + $0x234] sm:$0xff]
        %v306 = vld [vmem:[#allocation5 + $0x23c] sm:$0xf]
        %v307 = vld [vmem:[%s182] sm:$0xff]
        %v308 = vld [vmem:[%s182 + $0x8] sm:$0xff]
        %v309 = vld [vmem:[%s182 + $0x10] sm:$0xff]
        %v310 = vld [vmem:[%s182 + $0x18] sm:$0xff]
        %v311 = vld [vmem:[%s182 + $0x20] sm:$0xff]
        %v312 = vld [vmem:[%s182 + $0x28] sm:$0xff]
        %v313 = vld [vmem:[%s182 + $0x30] sm:$0xff]
        %v314 = vld [vmem:[%s182 + $0x38] sm:$0xff]
        %v315 = vld [vmem:[%s182 + $0x40] sm:$0xff]
        %v316 = vld [vmem:[%s182 + $0x48] sm:$0xff]
        %v317 = vld [vmem:[%s182 + $0x50] sm:$0xff]
        %v318 = vld [vmem:[%s182 + $0x58] sm:$0xff]
        %v319 = vld [vmem:[%s182 + $0x60] sm:$0xff]
        %v320 = vld [vmem:[%s182 + $0x68] sm:$0xff]
        %v321 = vld [vmem:[%s182 + $0x70] sm:$0xff]
        %v322 = vld [vmem:[%s182 + $0x78] sm:$0xff]
        %v323 = vld [vmem:[%s182 + $0x80] sm:$0xff]
        %v324 = vld [vmem:[%s182 + $0x88] sm:$0xff]
        %v325 = vld [vmem:[%s182 + $0x90] sm:$0xff]
        %v326 = vld [vmem:[%s182 + $0x98] sm:$0xff]
        %v327 = vld [vmem:[%s182 + $0xa0] sm:$0xff]
        %v328 = vld [vmem:[%s182 + $0xa8] sm:$0xff]
        %v329 = vld [vmem:[%s182 + $0xb0] sm:$0xff]
        %v330 = vld [vmem:[%s182 + $0xb8] sm:$0xff]
        %v331 = vld [vmem:[%s182 + $0xc0] sm:$0xff]
        %v332 = vld [vmem:[%s182 + $0xc8] sm:$0xff]
        %v333 = vld [vmem:[%s182 + $0xd0] sm:$0xff]
        %v334 = vld [vmem:[%s182 + $0xd8] sm:$0xff]
        %v335 = vld [vmem:[%s182 + $0xe0] sm:$0xff]
        %v336 = vld [vmem:[%s182 + $0xe8] sm:$0xff]
        %v337 = vld [vmem:[%s182 + $0xf0] sm:$0xff]
        %v338 = vld [vmem:[%s182 + $0xf8] sm:$0xff]
        %v339 = vld [vmem:[%s182 + $0x100] sm:$0xff]
        %v340 = vld [vmem:[%s182 + $0x108] sm:$0xff]
        %v341 = vld [vmem:[%s182 + $0x110] sm:$0xff]
        %v342 = vld [vmem:[%s182 + $0x118] sm:$0xff]
        %v343 = vld [vmem:[%s182 + $0x120] sm:$0xff]
        %v344 = vld [vmem:[%s182 + $0x128] sm:$0xff]
        %v345 = vld [vmem:[%s182 + $0x130] sm:$0xff]
        %v346 = vld [vmem:[%s182 + $0x138] sm:$0xff]
        %v347 = vld [vmem:[%s182 + $0x140] sm:$0xff]
        %v348 = vld [vmem:[%s182 + $0x148] sm:$0xff]
        %v349 = vld [vmem:[%s182 + $0x150] sm:$0xff]
        %v350 = vld [vmem:[%s182 + $0x158] sm:$0xff]
        %v351 = vld [vmem:[%s182 + $0x160] sm:$0xff]
        %v352 = vld [vmem:[%s182 + $0x168] sm:$0xff]
        %v353 = vld [vmem:[%s182 + $0x170] sm:$0xff]
        %v354 = vld [vmem:[%s182 + $0x178] sm:$0xff]
        %v355 = vld [vmem:[%s182 + $0x180] sm:$0xff]
        %v356 = vld [vmem:[%s182 + $0x188] sm:$0xff]
        %v357 = vld [vmem:[%s182 + $0x190] sm:$0xff]
        %v358 = vld [vmem:[%s182 + $0x198] sm:$0xff]
        %v359 = vld [vmem:[%s182 + $0x1a0] sm:$0xff]
        %v360 = vld [vmem:[%s182 + $0x1a8] sm:$0xff]
        %v361 = vld [vmem:[%s182 + $0x1b0] sm:$0xff]
        %v362 = vld [vmem:[%s182 + $0x1b8] sm:$0xff]
        %v363 = vld [vmem:[%s182 + $0x1c0] sm:$0xff]
        %v364 = vld [vmem:[%s182 + $0x1c8] sm:$0xff]
        %v365 = vld [vmem:[%s182 + $0x1d0] sm:$0xff]
        %v366 = vld [vmem:[%s182 + $0x1d8] sm:$0xff]
        %v367 = vld [vmem:[%s182 + $0x1e0] sm:$0xff]
        %v368 = vld [vmem:[%s182 + $0x1e8] sm:$0xff]
        %v369 = vld [vmem:[%s182 + $0x1f0] sm:$0xff]
        %v370 = vld [vmem:[%s182 + $0x1f8] sm:$0xff]
        %v371 = vld [vmem:[%s182 + $0x200] sm:$0xff]
        %v372 = vld [vmem:[%s182 + $0x208] sm:$0xff]
        %v373 = vld [vmem:[%s182 + $0x210] sm:$0xff]
        %v374 = vld [vmem:[%s182 + $0x218] sm:$0xff]
        %v375 = vld [vmem:[%s182 + $0x220] sm:$0xff]
        %v376 = vld [vmem:[%s182 + $0x228] sm:$0xff]
        %v377 = vld [vmem:[%s182 + $0x230] sm:$0xff]
        %v378 = vld [vmem:[%s182 + $0x238] sm:$0xff]
        %v379 = vld [vmem:[%s182 + $0x240] sm:$0xff]
        %v380 = vld [vmem:[%s182 + $0x248] sm:$0xff]
        %v381 = vld [vmem:[%s182 + $0x250] sm:$0xff]
        %v382 = vld [vmem:[%s182 + $0x258] sm:$0xff]
        %v383 = vld [vmem:[%s182 + $0x260] sm:$0xff]
        %v384 = vld [vmem:[%s182 + $0x268] sm:$0xff]
        %v385 = vld [vmem:[%s182 + $0x270] sm:$0xff]
        %v386 = vld [vmem:[%s182 + $0x278] sm:$0xff]
        %v387 = vld [vmem:[%s182 + $0x280] sm:$0xff]
        %v388 = vld [vmem:[%s182 + $0x288] sm:$0xff]
        %v389 = vld [vmem:[%s182 + $0x290] sm:$0xff]
        %v390 = vld [vmem:[%s182 + $0x298] sm:$0xff]
        %v391 = vld [vmem:[%s182 + $0x2a0] sm:$0xff]
        %v392 = vld [vmem:[%s182 + $0x2a8] sm:$0xff]
        %v393 = vld [vmem:[%s182 + $0x2b0] sm:$0xff]
        %v394 = vld [vmem:[%s182 + $0x2b8] sm:$0xff]
        %v395 = vld [vmem:[%s182 + $0x2c0] sm:$0xff]
        %v396 = vld [vmem:[%s182 + $0x2c8] sm:$0xff]
        %v397 = vld [vmem:[%s182 + $0x2d0] sm:$0xff]
        %v398 = vld [vmem:[%s182 + $0x2d8] sm:$0xff]
        %v399 = vld [vmem:[%s182 + $0x2e0] sm:$0xff]
        %v400 = vld [vmem:[%s182 + $0x2e8] sm:$0xff]
        %v401 = vld [vmem:[%s182 + $0x2f0] sm:$0xff]
        %v402 = vld [vmem:[%s182 + $0x2f8] sm:$0xff]
        %v403 = vpack.c.bf16 %v309, %v307
        %v404 = vpack.c.bf16 %v310, %v308
        %v405 = vpack.c.bf16 %v313, %v311
        %v406 = vpack.c.bf16 %v314, %v312
        %v407 = vpack.c.bf16 %v317, %v315
        %v408 = vpack.c.bf16 %v318, %v316
        %v409 = vpack.c.bf16 %v321, %v319
        %v410 = vpack.c.bf16 %v322, %v320
        %v411 = vpack.c.bf16 %v325, %v323
        %v412 = vpack.c.bf16 %v326, %v324
        %v413 = vpack.c.bf16 %v329, %v327
        %v414 = vpack.c.bf16 %v330, %v328
        %v415 = vpack.c.bf16 %v333, %v331
        %v416 = vpack.c.bf16 %v334, %v332
        %v417 = vpack.c.bf16 %v337, %v335
        %v418 = vpack.c.bf16 %v338, %v336
        %v419 = vpack.c.bf16 %v341, %v339
        %v420 = vpack.c.bf16 %v342, %v340
        %v421 = vpack.c.bf16 %v345, %v343
        %v422 = vpack.c.bf16 %v346, %v344
        %v423 = vpack.c.bf16 %v349, %v347
        %v424 = vpack.c.bf16 %v350, %v348
        %v425 = vpack.c.bf16 %v353, %v351
        %v426 = vpack.c.bf16 %v354, %v352
        %v427 = vpack.c.bf16 %v357, %v355
        %v428 = vpack.c.bf16 %v358, %v356
        %v429 = vpack.c.bf16 %v361, %v359
        %v430 = vpack.c.bf16 %v362, %v360
        %v431 = vpack.c.bf16 %v365, %v363
        %v432 = vpack.c.bf16 %v366, %v364
        %v433 = vpack.c.bf16 %v369, %v367
        %v434 = vpack.c.bf16 %v370, %v368
        %v435 = vpack.c.bf16 %v373, %v371
        %v436 = vpack.c.bf16 %v374, %v372
        %v437 = vpack.c.bf16 %v377, %v375
        %v438 = vpack.c.bf16 %v378, %v376
        %v439 = vpack.c.bf16 %v381, %v379
        %v440 = vpack.c.bf16 %v382, %v380
        %v441 = vpack.c.bf16 %v385, %v383
        %v442 = vpack.c.bf16 %v386, %v384
        %v443 = vpack.c.bf16 %v389, %v387
        %v444 = vpack.c.bf16 %v390, %v388
        %v445 = vpack.c.bf16 %v393, %v391
        %v446 = vpack.c.bf16 %v394, %v392
        %v447 = vpack.c.bf16 %v397, %v395
        %v448 = vpack.c.bf16 %v398, %v396
        %v449 = vpack.c.bf16 %v401, %v399
        %v450 = vpack.c.bf16 %v402, %v400
        %v547 = vunpack.c.l.b16 %v211
        %v548 = vunpack.c.h.b16 %v211
        %v549 = vunpack.c.l.b16 %v212
        %v550 = vunpack.c.l.b16 %v213
        %v551 = vunpack.c.h.b16 %v213
        %v552 = vunpack.c.l.b16 %v214
        %v553 = vunpack.c.l.b16 %v215
        %v554 = vunpack.c.h.b16 %v215
        %v555 = vunpack.c.l.b16 %v216
        %v556 = vunpack.c.l.b16 %v217
        %v557 = vunpack.c.h.b16 %v217
        %v558 = vunpack.c.l.b16 %v218
        %v559 = vunpack.c.l.b16 %v219
        %v560 = vunpack.c.h.b16 %v219
        %v561 = vunpack.c.l.b16 %v220
        %v562 = vunpack.c.l.b16 %v221
        %v563 = vunpack.c.h.b16 %v221
        %v564 = vunpack.c.l.b16 %v222
        %v565 = vunpack.c.l.b16 %v223
        %v566 = vunpack.c.h.b16 %v223
        %v567 = vunpack.c.l.b16 %v224
        %v568 = vunpack.c.l.b16 %v225
        %v569 = vunpack.c.h.b16 %v225
        %v570 = vunpack.c.l.b16 %v226
        %v571 = vunpack.c.l.b16 %v227
        %v572 = vunpack.c.h.b16 %v227
        %v573 = vunpack.c.l.b16 %v228
        %v574 = vunpack.c.l.b16 %v229
        %v575 = vunpack.c.h.b16 %v229
        %v576 = vunpack.c.l.b16 %v230
        %v577 = vunpack.c.l.b16 %v231
        %v578 = vunpack.c.h.b16 %v231
        %v579 = vunpack.c.l.b16 %v232
        %v580 = vunpack.c.l.b16 %v233
        %v581 = vunpack.c.h.b16 %v233
        %v582 = vunpack.c.l.b16 %v234
        %v583 = vunpack.c.l.b16 %v235
        %v584 = vunpack.c.h.b16 %v235
        %v585 = vunpack.c.l.b16 %v236
        %v586 = vunpack.c.l.b16 %v237
        %v587 = vunpack.c.h.b16 %v237
        %v588 = vunpack.c.l.b16 %v238
        %v589 = vunpack.c.l.b16 %v239
        %v590 = vunpack.c.h.b16 %v239
        %v591 = vunpack.c.l.b16 %v240
        %v592 = vunpack.c.l.b16 %v241
        %v593 = vunpack.c.h.b16 %v241
        %v594 = vunpack.c.l.b16 %v242
        %v595 = vunpack.c.l.b16 %v243
        %v596 = vunpack.c.h.b16 %v243
        %v597 = vunpack.c.l.b16 %v244
        %v598 = vunpack.c.l.b16 %v245
        %v599 = vunpack.c.h.b16 %v245
        %v600 = vunpack.c.l.b16 %v246
        %v601 = vunpack.c.l.b16 %v247
        %v602 = vunpack.c.h.b16 %v247
        %v603 = vunpack.c.l.b16 %v248
        %v604 = vunpack.c.l.b16 %v249
        %v605 = vunpack.c.h.b16 %v249
        %v606 = vunpack.c.l.b16 %v250
        %v607 = vunpack.c.l.b16 %v251
        %v608 = vunpack.c.h.b16 %v251
        %v609 = vunpack.c.l.b16 %v252
        %v610 = vunpack.c.l.b16 %v253
        %v611 = vunpack.c.h.b16 %v253
        %v612 = vunpack.c.l.b16 %v254
        %v613 = vunpack.c.l.b16 %v255
        %v614 = vunpack.c.h.b16 %v255
        %v615 = vunpack.c.l.b16 %v256
        %v616 = vunpack.c.l.b16 %v257
        %v617 = vunpack.c.h.b16 %v257
        %v618 = vunpack.c.l.b16 %v258
        %v619 = vunpack.c.l.b16 %v259
        %v620 = vunpack.c.h.b16 %v259
        %v621 = vunpack.c.l.b16 %v260
        %v622 = vunpack.c.l.b16 %v261
        %v623 = vunpack.c.h.b16 %v261
        %v624 = vunpack.c.l.b16 %v262
        %v625 = vunpack.c.l.b16 %v263
        %v626 = vunpack.c.h.b16 %v263
        %v627 = vunpack.c.l.b16 %v264
        %v628 = vunpack.c.l.b16 %v265
        %v629 = vunpack.c.h.b16 %v265
        %v630 = vunpack.c.l.b16 %v266
        %v631 = vunpack.c.l.b16 %v267
        %v632 = vunpack.c.h.b16 %v267
        %v633 = vunpack.c.l.b16 %v268
        %v634 = vunpack.c.l.b16 %v269
        %v635 = vunpack.c.h.b16 %v269
        %v636 = vunpack.c.l.b16 %v270
        %v637 = vunpack.c.l.b16 %v271
        %v638 = vunpack.c.h.b16 %v271
        %v639 = vunpack.c.l.b16 %v272
        %v640 = vunpack.c.l.b16 %v273
        %v641 = vunpack.c.h.b16 %v273
        %v642 = vunpack.c.l.b16 %v274
        %v643 = vunpack.c.l.b16 %v275
        %v644 = vunpack.c.h.b16 %v275
        %v645 = vunpack.c.l.b16 %v276
        %v646 = vunpack.c.l.b16 %v277
        %v647 = vunpack.c.h.b16 %v277
        %v648 = vunpack.c.l.b16 %v278
        %v649 = vunpack.c.l.b16 %v279
        %v650 = vunpack.c.h.b16 %v279
        %v651 = vunpack.c.l.b16 %v280
        %v652 = vunpack.c.l.b16 %v281
        %v653 = vunpack.c.h.b16 %v281
        %v654 = vunpack.c.l.b16 %v282
        %v655 = vunpack.c.l.b16 %v283
        %v656 = vunpack.c.h.b16 %v283
        %v657 = vunpack.c.l.b16 %v284
        %v658 = vunpack.c.l.b16 %v285
        %v659 = vunpack.c.h.b16 %v285
        %v660 = vunpack.c.l.b16 %v286
        %v661 = vunpack.c.l.b16 %v287
        %v662 = vunpack.c.h.b16 %v287
        %v663 = vunpack.c.l.b16 %v288
        %v664 = vunpack.c.l.b16 %v289
        %v665 = vunpack.c.h.b16 %v289
        %v666 = vunpack.c.l.b16 %v290
        %v667 = vunpack.c.l.b16 %v291
        %v668 = vunpack.c.h.b16 %v291
        %v669 = vunpack.c.l.b16 %v292
        %v670 = vunpack.c.l.b16 %v293
        %v671 = vunpack.c.h.b16 %v293
        %v672 = vunpack.c.l.b16 %v294
        %v673 = vunpack.c.l.b16 %v295
        %v674 = vunpack.c.h.b16 %v295
        %v675 = vunpack.c.l.b16 %v296
        %v676 = vunpack.c.l.b16 %v297
        %v677 = vunpack.c.h.b16 %v297
        %v678 = vunpack.c.l.b16 %v298
        %v679 = vunpack.c.l.b16 %v299
        %v680 = vunpack.c.h.b16 %v299
        %v681 = vunpack.c.l.b16 %v300
        %v682 = vunpack.c.l.b16 %v301
        %v683 = vunpack.c.h.b16 %v301
        %v684 = vunpack.c.l.b16 %v302
        %v685 = vunpack.c.l.b16 %v303
        %v686 = vunpack.c.h.b16 %v303
        %v687 = vunpack.c.l.b16 %v304
        %v688 = vunpack.c.l.b16 %v305
        %v689 = vunpack.c.h.b16 %v305
        %v690 = vunpack.c.l.b16 %v306
        %v691 = vpack.c.b16 %v550, %v547
        %v692 = vpack.c.b16 %v551, %v548
        %v693 = vpack.c.b16 %v552, %v549
        %v694 = vpack.c.b16 %v556, %v553
        %v695 = vpack.c.b16 %v557, %v554
        %v696 = vpack.c.b16 %v558, %v555
        %v697 = vpack.c.b16 %v562, %v559
        %v698 = vpack.c.b16 %v563, %v560
        %v699 = vpack.c.b16 %v564, %v561
        %v700 = vpack.c.b16 %v568, %v565
        %v701 = vpack.c.b16 %v569, %v566
        %v702 = vpack.c.b16 %v570, %v567
        %v703 = vpack.c.b16 %v574, %v571
        %v704 = vpack.c.b16 %v575, %v572
        %v705 = vpack.c.b16 %v576, %v573
        %v706 = vpack.c.b16 %v580, %v577
        %v707 = vpack.c.b16 %v581, %v578
        %v708 = vpack.c.b16 %v582, %v579
        %v709 = vpack.c.b16 %v586, %v583
        %v710 = vpack.c.b16 %v587, %v584
        %v711 = vpack.c.b16 %v588, %v585
        %v712 = vpack.c.b16 %v592, %v589
        %v713 = vpack.c.b16 %v593, %v590
        %v714 = vpack.c.b16 %v594, %v591
        %v715 = vpack.c.b16 %v598, %v595
        %v716 = vpack.c.b16 %v599, %v596
        %v717 = vpack.c.b16 %v600, %v597
        %v718 = vpack.c.b16 %v604, %v601
        %v719 = vpack.c.b16 %v605, %v602
        %v720 = vpack.c.b16 %v606, %v603
        %v721 = vpack.c.b16 %v610, %v607
        %v722 = vpack.c.b16 %v611, %v608
        %v723 = vpack.c.b16 %v612, %v609
        %v724 = vpack.c.b16 %v616, %v613
        %v725 = vpack.c.b16 %v617, %v614
        %v726 = vpack.c.b16 %v618, %v615
        %v727 = vpack.c.b16 %v622, %v619
        %v728 = vpack.c.b16 %v623, %v620
        %v729 = vpack.c.b16 %v624, %v621
        %v730 = vpack.c.b16 %v628, %v625
        %v731 = vpack.c.b16 %v629, %v626
        %v732 = vpack.c.b16 %v630, %v627
        %v733 = vpack.c.b16 %v634, %v631
        %v734 = vpack.c.b16 %v635, %v632
        %v735 = vpack.c.b16 %v636, %v633
        %v736 = vpack.c.b16 %v640, %v637
        %v737 = vpack.c.b16 %v641, %v638
        %v738 = vpack.c.b16 %v642, %v639
        %v739 = vpack.c.b16 %v646, %v643
        %v740 = vpack.c.b16 %v647, %v644
        %v741 = vpack.c.b16 %v648, %v645
        %v742 = vpack.c.b16 %v652, %v649
        %v743 = vpack.c.b16 %v653, %v650
        %v744 = vpack.c.b16 %v654, %v651
        %v745 = vpack.c.b16 %v658, %v655
        %v746 = vpack.c.b16 %v659, %v656
        %v747 = vpack.c.b16 %v660, %v657
        %v748 = vpack.c.b16 %v664, %v661
        %v749 = vpack.c.b16 %v665, %v662
        %v750 = vpack.c.b16 %v666, %v663
        %v751 = vpack.c.b16 %v670, %v667
        %v752 = vpack.c.b16 %v671, %v668
        %v753 = vpack.c.b16 %v672, %v669
        %v754 = vpack.c.b16 %v676, %v673
        %v755 = vpack.c.b16 %v677, %v674
        %v756 = vpack.c.b16 %v678, %v675
        %v757 = vpack.c.b16 %v682, %v679
        %v758 = vpack.c.b16 %v683, %v680
        %v759 = vpack.c.b16 %v684, %v681
        %v760 = vpack.c.b16 %v688, %v685
        %v761 = vpack.c.b16 %v689, %v686
        %v762 = vpack.c.b16 %v690, %v687
        %835 = vmatpush.bf16.msra.mxu0 %v417
        %836 = vmatpush.bf16.msra.mxu0 %v415
        %837 = vmatpush.bf16.msra.mxu0 %v413
        %838 = vmatpush.bf16.msra.mxu0 %v411
        %839 = vmatpush.bf16.msra.mxu0 %v409
        %840 = vmatpush.bf16.msra.mxu0 %v407
        %841 = vmatpush.bf16.msra.mxu0 %v405
        %842 = vmatpush.bf16.msra.mxu0 %v403
        %843 = vmatmul.bf16.gmra.mxu0 %v691
        %v844 = vpop.f32.mrf.mxu0
        %v845 = vadd.f32 0.0, %v844
        %v846 = vpop.f32.mrf.mxu0
        %v847 = vadd.f32 0.0, %v846
        %848 = vmatmul.bf16.gmra.mxu0 %v694
        %v849 = vpop.f32.mrf.mxu0
        %v850 = vadd.f32 0.0, %v849
        %v851 = vpop.f32.mrf.mxu0
        %v852 = vadd.f32 0.0, %v851
        %853 = vmatmul.bf16.gmra.mxu0 %v697
        %v854 = vpop.f32.mrf.mxu0
        %v855 = vadd.f32 0.0, %v854
        %v856 = vpop.f32.mrf.mxu0
        %v857 = vadd.f32 0.0, %v856
        %858 = vmatmul.bf16.gmra.mxu0 %v700
        %v859 = vpop.f32.mrf.mxu0
        %v860 = vadd.f32 0.0, %v859
        %v861 = vpop.f32.mrf.mxu0
        %v862 = vadd.f32 0.0, %v861
        %863 = vmatmul.bf16.gmra.mxu0 %v703
        %v864 = vpop.f32.mrf.mxu0
        %v865 = vadd.f32 0.0, %v864
        %v866 = vpop.f32.mrf.mxu0
        %v867 = vadd.f32 0.0, %v866
        %868 = vmatmul.bf16.gmra.mxu0 %v706
        %v869 = vpop.f32.mrf.mxu0
        %v870 = vadd.f32 0.0, %v869
        %v871 = vpop.f32.mrf.mxu0
        %v872 = vadd.f32 0.0, %v871
        %873 = vmatmul.bf16.gmra.mxu0 %v709
        %v874 = vpop.f32.mrf.mxu0
        %v875 = vadd.f32 0.0, %v874
        %v876 = vpop.f32.mrf.mxu0
        %v877 = vadd.f32 0.0, %v876
        %878 = vmatmul.bf16.gmra.mxu0 %v712
        %v879 = vpop.f32.mrf.mxu0
        %v880 = vadd.f32 0.0, %v879
        %v881 = vpop.f32.mrf.mxu0
        %v882 = vadd.f32 0.0, %v881
        %883 = vmatmul.bf16.gmra.mxu0 %v715
        %v884 = vpop.f32.mrf.mxu0
        %v885 = vadd.f32 0.0, %v884
        %v886 = vpop.f32.mrf.mxu0
        %v887 = vadd.f32 0.0, %v886
        %888 = vmatmul.bf16.gmra.mxu0 %v718
        %v889 = vpop.f32.mrf.mxu0
        %v890 = vadd.f32 0.0, %v889
        %v891 = vpop.f32.mrf.mxu0
        %v892 = vadd.f32 0.0, %v891
        %893 = vmatmul.bf16.gmra.mxu0 %v721
        %v894 = vpop.f32.mrf.mxu0
        %v895 = vadd.f32 0.0, %v894
        %v896 = vpop.f32.mrf.mxu0
        %v897 = vadd.f32 0.0, %v896
        %898 = vmatmul.bf16.gmra.mxu0 %v724
        %v899 = vpop.f32.mrf.mxu0
        %v900 = vadd.f32 0.0, %v899
        %v901 = vpop.f32.mrf.mxu0
        %v902 = vadd.f32 0.0, %v901
        %903 = vmatmul.bf16.gmra.mxu0 %v727
        %v904 = vpop.f32.mrf.mxu0
        %v905 = vadd.f32 0.0, %v904
        %v906 = vpop.f32.mrf.mxu0
        %v907 = vadd.f32 0.0, %v906
        %908 = vmatmul.bf16.gmra.mxu0 %v730
        %v909 = vpop.f32.mrf.mxu0
        %v910 = vadd.f32 0.0, %v909
        %v911 = vpop.f32.mrf.mxu0
        %v912 = vadd.f32 0.0, %v911
        %913 = vmatmul.bf16.gmra.mxu0 %v733
        %v914 = vpop.f32.mrf.mxu0
        %v915 = vadd.f32 0.0, %v914
        %v916 = vpop.f32.mrf.mxu0
        %v917 = vadd.f32 0.0, %v916
        %918 = vmatmul.bf16.gmra.mxu0 %v736
        %v919 = vpop.f32.mrf.mxu0
        %v920 = vadd.f32 0.0, %v919
        %v921 = vpop.f32.mrf.mxu0
        %v922 = vadd.f32 0.0, %v921
        %923 = vmatmul.bf16.gmra.mxu0 %v739
        %v924 = vpop.f32.mrf.mxu0
        %v925 = vadd.f32 0.0, %v924
        %v926 = vpop.f32.mrf.mxu0
        %v927 = vadd.f32 0.0, %v926
        %928 = vmatmul.bf16.gmra.mxu0 %v742
        %v929 = vpop.f32.mrf.mxu0
        %v930 = vadd.f32 0.0, %v929
        %v931 = vpop.f32.mrf.mxu0
        %v932 = vadd.f32 0.0, %v931
        %933 = vmatmul.bf16.gmra.mxu0 %v745
        %v934 = vpop.f32.mrf.mxu0
        %v935 = vadd.f32 0.0, %v934
        %v936 = vpop.f32.mrf.mxu0
        %v937 = vadd.f32 0.0, %v936
        %938 = vmatmul.bf16.gmra.mxu0 %v748
        %v939 = vpop.f32.mrf.mxu0
        %v940 = vadd.f32 0.0, %v939
        %v941 = vpop.f32.mrf.mxu0
        %v942 = vadd.f32 0.0, %v941
        %943 = vmatmul.bf16.gmra.mxu0 %v751
        %v944 = vpop.f32.mrf.mxu0
        %v945 = vadd.f32 0.0, %v944
        %v946 = vpop.f32.mrf.mxu0
        %v947 = vadd.f32 0.0, %v946
        %948 = vmatmul.bf16.gmra.mxu0 %v754
        %v949 = vpop.f32.mrf.mxu0
        %v950 = vadd.f32 0.0, %v949
        %v951 = vpop.f32.mrf.mxu0
        %v952 = vadd.f32 0.0, %v951
        %953 = vmatmul.bf16.gmra.mxu0 %v757
        %v954 = vpop.f32.mrf.mxu0
        %v955 = vadd.f32 0.0, %v954
        %v956 = vpop.f32.mrf.mxu0
        %v957 = vadd.f32 0.0, %v956
        %958 = vmatmul.bf16.gmra.mxu0 %v760
        %v959 = vpop.f32.mrf.mxu0
        %v960 = vadd.f32 0.0, %v959
        %v961 = vpop.f32.mrf.mxu0
        %v962 = vadd.f32 0.0, %v961
        %963 = vdwg.mxu0
        %964 = vmatpush.bf16.msra.mxu0 %v433
        %965 = vmatpush.bf16.msra.mxu0 %v431
        %966 = vmatpush.bf16.msra.mxu0 %v429
        %967 = vmatpush.bf16.msra.mxu0 %v427
        %968 = vmatpush.bf16.msra.mxu0 %v425
        %969 = vmatpush.bf16.msra.mxu0 %v423
        %970 = vmatpush.bf16.msra.mxu0 %v421
        %971 = vmatpush.bf16.msra.mxu0 %v419
        %972 = vmatmul.bf16.gmra.mxu0 %v692
        %v973 = vpop.f32.mrf.mxu0
        %v974 = vadd.f32 %v845, %v973
        %v975 = vpop.f32.mrf.mxu0
        %v976 = vadd.f32 %v847, %v975
        %977 = vmatmul.bf16.gmra.mxu0 %v695
        %v978 = vpop.f32.mrf.mxu0
        %v979 = vadd.f32 %v850, %v978
        %v980 = vpop.f32.mrf.mxu0
        %v981 = vadd.f32 %v852, %v980
        %982 = vmatmul.bf16.gmra.mxu0 %v698
        %v983 = vpop.f32.mrf.mxu0
        %v984 = vadd.f32 %v855, %v983
        %v985 = vpop.f32.mrf.mxu0
        %v986 = vadd.f32 %v857, %v985
        %987 = vmatmul.bf16.gmra.mxu0 %v701
        %v988 = vpop.f32.mrf.mxu0
        %v989 = vadd.f32 %v860, %v988
        %v990 = vpop.f32.mrf.mxu0
        %v991 = vadd.f32 %v862, %v990
        %992 = vmatmul.bf16.gmra.mxu0 %v704
        %v993 = vpop.f32.mrf.mxu0
        %v994 = vadd.f32 %v865, %v993
        %v995 = vpop.f32.mrf.mxu0
        %v996 = vadd.f32 %v867, %v995
        %997 = vmatmul.bf16.gmra.mxu0 %v707
        %v998 = vpop.f32.mrf.mxu0
        %v999 = vadd.f32 %v870, %v998
        %v1000 = vpop.f32.mrf.mxu0
        %v1001 = vadd.f32 %v872, %v1000
        %1002 = vmatmul.bf16.gmra.mxu0 %v710
        %v1003 = vpop.f32.mrf.mxu0
        %v1004 = vadd.f32 %v875, %v1003
        %v1005 = vpop.f32.mrf.mxu0
        %v1006 = vadd.f32 %v877, %v1005
        %1007 = vmatmul.bf16.gmra.mxu0 %v713
        %v1008 = vpop.f32.mrf.mxu0
        %v1009 = vadd.f32 %v880, %v1008
        %v1010 = vpop.f32.mrf.mxu0
        %v1011 = vadd.f32 %v882, %v1010
        %1012 = vmatmul.bf16.gmra.mxu0 %v716
        %v1013 = vpop.f32.mrf.mxu0
        %v1014 = vadd.f32 %v885, %v1013
        %v1015 = vpop.f32.mrf.mxu0
        %v1016 = vadd.f32 %v887, %v1015
        %1017 = vmatmul.bf16.gmra.mxu0 %v719
        %v1018 = vpop.f32.mrf.mxu0
        %v1019 = vadd.f32 %v890, %v1018
        %v1020 = vpop.f32.mrf.mxu0
        %v1021 = vadd.f32 %v892, %v1020
        %1022 = vmatmul.bf16.gmra.mxu0 %v722
        %v1023 = vpop.f32.mrf.mxu0
        %v1024 = vadd.f32 %v895, %v1023
        %v1025 = vpop.f32.mrf.mxu0
        %v1026 = vadd.f32 %v897, %v1025
        %1027 = vmatmul.bf16.gmra.mxu0 %v725
        %v1028 = vpop.f32.mrf.mxu0
        %v1029 = vadd.f32 %v900, %v1028
        %v1030 = vpop.f32.mrf.mxu0
        %v1031 = vadd.f32 %v902, %v1030
        %1032 = vmatmul.bf16.gmra.mxu0 %v728
        %v1033 = vpop.f32.mrf.mxu0
        %v1034 = vadd.f32 %v905, %v1033
        %v1035 = vpop.f32.mrf.mxu0
        %v1036 = vadd.f32 %v907, %v1035
        %1037 = vmatmul.bf16.gmra.mxu0 %v731
        %v1038 = vpop.f32.mrf.mxu0
        %v1039 = vadd.f32 %v910, %v1038
        %v1040 = vpop.f32.mrf.mxu0
        %v1041 = vadd.f32 %v912, %v1040
        %1042 = vmatmul.bf16.gmra.mxu0 %v734
        %v1043 = vpop.f32.mrf.mxu0
        %v1044 = vadd.f32 %v915, %v1043
        %v1045 = vpop.f32.mrf.mxu0
        %v1046 = vadd.f32 %v917, %v1045
        %1047 = vmatmul.bf16.gmra.mxu0 %v737
        %v1048 = vpop.f32.mrf.mxu0
        %v1049 = vadd.f32 %v920, %v1048
        %v1050 = vpop.f32.mrf.mxu0
        %v1051 = vadd.f32 %v922, %v1050
        %1052 = vmatmul.bf16.gmra.mxu0 %v740
        %v1053 = vpop.f32.mrf.mxu0
        %v1054 = vadd.f32 %v925, %v1053
        %v1055 = vpop.f32.mrf.mxu0
        %v1056 = vadd.f32 %v927, %v1055
        %1057 = vmatmul.bf16.gmra.mxu0 %v743
        %v1058 = vpop.f32.mrf.mxu0
        %v1059 = vadd.f32 %v930, %v1058
        %v1060 = vpop.f32.mrf.mxu0
        %v1061 = vadd.f32 %v932, %v1060
        %1062 = vmatmul.bf16.gmra.mxu0 %v746
        %v1063 = vpop.f32.mrf.mxu0
        %v1064 = vadd.f32 %v935, %v1063
        %v1065 = vpop.f32.mrf.mxu0
        %v1066 = vadd.f32 %v937, %v1065
        %1067 = vmatmul.bf16.gmra.mxu0 %v749
        %v1068 = vpop.f32.mrf.mxu0
        %v1069 = vadd.f32 %v940, %v1068
        %v1070 = vpop.f32.mrf.mxu0
        %v1071 = vadd.f32 %v942, %v1070
        %1072 = vmatmul.bf16.gmra.mxu0 %v752
        %v1073 = vpop.f32.mrf.mxu0
        %v1074 = vadd.f32 %v945, %v1073
        %v1075 = vpop.f32.mrf.mxu0
        %v1076 = vadd.f32 %v947, %v1075
        %1077 = vmatmul.bf16.gmra.mxu0 %v755
        %v1078 = vpop.f32.mrf.mxu0
        %v1079 = vadd.f32 %v950, %v1078
        %v1080 = vpop.f32.mrf.mxu0
        %v1081 = vadd.f32 %v952, %v1080
        %1082 = vmatmul.bf16.gmra.mxu0 %v758
        %v1083 = vpop.f32.mrf.mxu0
        %v1084 = vadd.f32 %v955, %v1083
        %v1085 = vpop.f32.mrf.mxu0
        %v1086 = vadd.f32 %v957, %v1085
        %1087 = vmatmul.bf16.gmra.mxu0 %v761
        %v1088 = vpop.f32.mrf.mxu0
        %v1089 = vadd.f32 %v960, %v1088
        %v1090 = vpop.f32.mrf.mxu0
        %v1091 = vadd.f32 %v962, %v1090
        %1092 = vdwg.mxu0
        %1093 = vmatpush.bf16.msra.mxu0 %v449
        %1094 = vmatpush.bf16.msra.mxu0 %v447
        %1095 = vmatpush.bf16.msra.mxu0 %v445
        %1096 = vmatpush.bf16.msra.mxu0 %v443
        %1097 = vmatpush.bf16.msra.mxu0 %v441
        %1098 = vmatpush.bf16.msra.mxu0 %v439
        %1099 = vmatpush.bf16.msra.mxu0 %v437
        %1100 = vmatpush.bf16.msra.mxu0 %v435
        %1101 = vmatmul.bf16.gmra.mxu0 %v693
        %v1102 = vpop.f32.mrf.mxu0
        %v1103 = vadd.f32 %v974, %v1102
        %v1104 = vpop.f32.mrf.mxu0
        %v1105 = vadd.f32 %v976, %v1104
        %1106 = vmatmul.bf16.gmra.mxu0 %v696
        %v1107 = vpop.f32.mrf.mxu0
        %v1108 = vadd.f32 %v979, %v1107
        %v1109 = vpop.f32.mrf.mxu0
        %v1110 = vadd.f32 %v981, %v1109
        %1111 = vmatmul.bf16.gmra.mxu0 %v699
        %v1112 = vpop.f32.mrf.mxu0
        %v1113 = vadd.f32 %v984, %v1112
        %v1114 = vpop.f32.mrf.mxu0
        %v1115 = vadd.f32 %v986, %v1114
        %1116 = vmatmul.bf16.gmra.mxu0 %v702
        %v1117 = vpop.f32.mrf.mxu0
        %v1118 = vadd.f32 %v989, %v1117
        %v1119 = vpop.f32.mrf.mxu0
        %v1120 = vadd.f32 %v991, %v1119
        %1121 = vmatmul.bf16.gmra.mxu0 %v705
        %v1122 = vpop.f32.mrf.mxu0
        %v1123 = vadd.f32 %v994, %v1122
        %v1124 = vpop.f32.mrf.mxu0
        %v1125 = vadd.f32 %v996, %v1124
        %1126 = vmatmul.bf16.gmra.mxu0 %v708
        %v1127 = vpop.f32.mrf.mxu0
        %v1128 = vadd.f32 %v999, %v1127
        %v1129 = vpop.f32.mrf.mxu0
        %v1130 = vadd.f32 %v1001, %v1129
        %1131 = vmatmul.bf16.gmra.mxu0 %v711
        %v1132 = vpop.f32.mrf.mxu0
        %v1133 = vadd.f32 %v1004, %v1132
        %v1134 = vpop.f32.mrf.mxu0
        %v1135 = vadd.f32 %v1006, %v1134
        %1136 = vmatmul.bf16.gmra.mxu0 %v714
        %v1137 = vpop.f32.mrf.mxu0
        %v1138 = vadd.f32 %v1009, %v1137
        %v1139 = vpop.f32.mrf.mxu0
        %v1140 = vadd.f32 %v1011, %v1139
        %1141 = vmatmul.bf16.gmra.mxu0 %v717
        %v1142 = vpop.f32.mrf.mxu0
        %v1143 = vadd.f32 %v1014, %v1142
        %v1144 = vpop.f32.mrf.mxu0
        %v1145 = vadd.f32 %v1016, %v1144
        %1146 = vmatmul.bf16.gmra.mxu0 %v720
        %v1147 = vpop.f32.mrf.mxu0
        %v1148 = vadd.f32 %v1019, %v1147
        %v1149 = vpop.f32.mrf.mxu0
        %v1150 = vadd.f32 %v1021, %v1149
        %1151 = vmatmul.bf16.gmra.mxu0 %v723
        %v1152 = vpop.f32.mrf.mxu0
        %v1153 = vadd.f32 %v1024, %v1152
        %v1154 = vpop.f32.mrf.mxu0
        %v1155 = vadd.f32 %v1026, %v1154
        %1156 = vmatmul.bf16.gmra.mxu0 %v726
        %v1157 = vpop.f32.mrf.mxu0
        %v1158 = vadd.f32 %v1029, %v1157
        %v1159 = vpop.f32.mrf.mxu0
        %v1160 = vadd.f32 %v1031, %v1159
        %1161 = vmatmul.bf16.gmra.mxu0 %v729
        %v1162 = vpop.f32.mrf.mxu0
        %v1163 = vadd.f32 %v1034, %v1162
        %v1164 = vpop.f32.mrf.mxu0
        %v1165 = vadd.f32 %v1036, %v1164
        %1166 = vmatmul.bf16.gmra.mxu0 %v732
        %v1167 = vpop.f32.mrf.mxu0
        %v1168 = vadd.f32 %v1039, %v1167
        %v1169 = vpop.f32.mrf.mxu0
        %v1170 = vadd.f32 %v1041, %v1169
        %1171 = vmatmul.bf16.gmra.mxu0 %v735
        %v1172 = vpop.f32.mrf.mxu0
        %v1173 = vadd.f32 %v1044, %v1172
        %v1174 = vpop.f32.mrf.mxu0
        %v1175 = vadd.f32 %v1046, %v1174
        %1176 = vmatmul.bf16.gmra.mxu0 %v738
        %v1177 = vpop.f32.mrf.mxu0
        %v1178 = vadd.f32 %v1049, %v1177
        %v1179 = vpop.f32.mrf.mxu0
        %v1180 = vadd.f32 %v1051, %v1179
        %1181 = vmatmul.bf16.gmra.mxu0 %v741
        %v1182 = vpop.f32.mrf.mxu0
        %v1183 = vadd.f32 %v1054, %v1182
        %v1184 = vpop.f32.mrf.mxu0
        %v1185 = vadd.f32 %v1056, %v1184
        %1186 = vmatmul.bf16.gmra.mxu0 %v744
        %v1187 = vpop.f32.mrf.mxu0
        %v1188 = vadd.f32 %v1059, %v1187
        %v1189 = vpop.f32.mrf.mxu0
        %v1190 = vadd.f32 %v1061, %v1189
        %1191 = vmatmul.bf16.gmra.mxu0 %v747
        %v1192 = vpop.f32.mrf.mxu0
        %v1193 = vadd.f32 %v1064, %v1192
        %v1194 = vpop.f32.mrf.mxu0
        %v1195 = vadd.f32 %v1066, %v1194
        %1196 = vmatmul.bf16.gmra.mxu0 %v750
        %v1197 = vpop.f32.mrf.mxu0
        %v1198 = vadd.f32 %v1069, %v1197
        %v1199 = vpop.f32.mrf.mxu0
        %v1200 = vadd.f32 %v1071, %v1199
        %1201 = vmatmul.bf16.gmra.mxu0 %v753
        %v1202 = vpop.f32.mrf.mxu0
        %v1203 = vadd.f32 %v1074, %v1202
        %v1204 = vpop.f32.mrf.mxu0
        %v1205 = vadd.f32 %v1076, %v1204
        %1206 = vmatmul.bf16.gmra.mxu0 %v756
        %v1207 = vpop.f32.mrf.mxu0
        %v1208 = vadd.f32 %v1079, %v1207
        %v1209 = vpop.f32.mrf.mxu0
        %v1210 = vadd.f32 %v1081, %v1209
        %1211 = vmatmul.bf16.gmra.mxu0 %v759
        %v1212 = vpop.f32.mrf.mxu0
        %v1213 = vadd.f32 %v1084, %v1212
        %v1214 = vpop.f32.mrf.mxu0
        %v1215 = vadd.f32 %v1086, %v1214
        %1216 = vmatmul.bf16.gmra.mxu0 %v762
        %v1217 = vpop.f32.mrf.mxu0
        %v1218 = vadd.f32 %v1089, %v1217
        %v1219 = vpop.f32.mrf.mxu0
        %v1220 = vadd.f32 %v1091, %v1219
        %1221 = vdwg.mxu0
        %1222 = vmatpush.bf16.msra.mxu0 %v418
        %1223 = vmatpush.bf16.msra.mxu0 %v416
        %1224 = vmatpush.bf16.msra.mxu0 %v414
        %1225 = vmatpush.bf16.msra.mxu0 %v412
        %1226 = vmatpush.bf16.msra.mxu0 %v410
        %1227 = vmatpush.bf16.msra.mxu0 %v408
        %1228 = vmatpush.bf16.msra.mxu0 %v406
        %1229 = vmatpush.bf16.msra.mxu0 %v404
        %1230 = vmatmul.bf16.gmra.mxu0 %v691
        %v1231 = vpop.f32.mrf.mxu0
        %v1232 = vadd.f32 0.0, %v1231
        %v1233 = vpop.f32.mrf.mxu0
        %v1234 = vadd.f32 0.0, %v1233
        %1235 = vmatmul.bf16.gmra.mxu0 %v694
        %v1236 = vpop.f32.mrf.mxu0
        %v1237 = vadd.f32 0.0, %v1236
        %v1238 = vpop.f32.mrf.mxu0
        %v1239 = vadd.f32 0.0, %v1238
        %1240 = vmatmul.bf16.gmra.mxu0 %v697
        %v1241 = vpop.f32.mrf.mxu0
        %v1242 = vadd.f32 0.0, %v1241
        %v1243 = vpop.f32.mrf.mxu0
        %v1244 = vadd.f32 0.0, %v1243
        %1245 = vmatmul.bf16.gmra.mxu0 %v700
        %v1246 = vpop.f32.mrf.mxu0
        %v1247 = vadd.f32 0.0, %v1246
        %v1248 = vpop.f32.mrf.mxu0
        %v1249 = vadd.f32 0.0, %v1248
        %1250 = vmatmul.bf16.gmra.mxu0 %v703
        %v1251 = vpop.f32.mrf.mxu0
        %v1252 = vadd.f32 0.0, %v1251
        %v1253 = vpop.f32.mrf.mxu0
        %v1254 = vadd.f32 0.0, %v1253
        %1255 = vmatmul.bf16.gmra.mxu0 %v706
        %v1256 = vpop.f32.mrf.mxu0
        %v1257 = vadd.f32 0.0, %v1256
        %v1258 = vpop.f32.mrf.mxu0
        %v1259 = vadd.f32 0.0, %v1258
        %1260 = vmatmul.bf16.gmra.mxu0 %v709
        %v1261 = vpop.f32.mrf.mxu0
        %v1262 = vadd.f32 0.0, %v1261
        %v1263 = vpop.f32.mrf.mxu0
        %v1264 = vadd.f32 0.0, %v1263
        %1265 = vmatmul.bf16.gmra.mxu0 %v712
        %v1266 = vpop.f32.mrf.mxu0
        %v1267 = vadd.f32 0.0, %v1266
        %v1268 = vpop.f32.mrf.mxu0
        %v1269 = vadd.f32 0.0, %v1268
        %1270 = vmatmul.bf16.gmra.mxu0 %v715
        %v1271 = vpop.f32.mrf.mxu0
        %v1272 = vadd.f32 0.0, %v1271
        %v1273 = vpop.f32.mrf.mxu0
        %v1274 = vadd.f32 0.0, %v1273
        %1275 = vmatmul.bf16.gmra.mxu0 %v718
        %v1276 = vpop.f32.mrf.mxu0
        %v1277 = vadd.f32 0.0, %v1276
        %v1278 = vpop.f32.mrf.mxu0
        %v1279 = vadd.f32 0.0, %v1278
        %1280 = vmatmul.bf16.gmra.mxu0 %v721
        %v1281 = vpop.f32.mrf.mxu0
        %v1282 = vadd.f32 0.0, %v1281
        %v1283 = vpop.f32.mrf.mxu0
        %v1284 = vadd.f32 0.0, %v1283
        %1285 = vmatmul.bf16.gmra.mxu0 %v724
        %v1286 = vpop.f32.mrf.mxu0
        %v1287 = vadd.f32 0.0, %v1286
        %v1288 = vpop.f32.mrf.mxu0
        %v1289 = vadd.f32 0.0, %v1288
        %1290 = vmatmul.bf16.gmra.mxu0 %v727
        %v1291 = vpop.f32.mrf.mxu0
        %v1292 = vadd.f32 0.0, %v1291
        %v1293 = vpop.f32.mrf.mxu0
        %v1294 = vadd.f32 0.0, %v1293
        %1295 = vmatmul.bf16.gmra.mxu0 %v730
        %v1296 = vpop.f32.mrf.mxu0
        %v1297 = vadd.f32 0.0, %v1296
        %v1298 = vpop.f32.mrf.mxu0
        %v1299 = vadd.f32 0.0, %v1298
        %1300 = vmatmul.bf16.gmra.mxu0 %v733
        %v1301 = vpop.f32.mrf.mxu0
        %v1302 = vadd.f32 0.0, %v1301
        %v1303 = vpop.f32.mrf.mxu0
        %v1304 = vadd.f32 0.0, %v1303
        %1305 = vmatmul.bf16.gmra.mxu0 %v736
        %v1306 = vpop.f32.mrf.mxu0
        %v1307 = vadd.f32 0.0, %v1306
        %v1308 = vpop.f32.mrf.mxu0
        %v1309 = vadd.f32 0.0, %v1308
        %1310 = vmatmul.bf16.gmra.mxu0 %v739
        %v1311 = vpop.f32.mrf.mxu0
        %v1312 = vadd.f32 0.0, %v1311
        %v1313 = vpop.f32.mrf.mxu0
        %v1314 = vadd.f32 0.0, %v1313
        %1315 = vmatmul.bf16.gmra.mxu0 %v742
        %v1316 = vpop.f32.mrf.mxu0
        %v1317 = vadd.f32 0.0, %v1316
        %v1318 = vpop.f32.mrf.mxu0
        %v1319 = vadd.f32 0.0, %v1318
        %1320 = vmatmul.bf16.gmra.mxu0 %v745
        %v1321 = vpop.f32.mrf.mxu0
        %v1322 = vadd.f32 0.0, %v1321
        %v1323 = vpop.f32.mrf.mxu0
        %v1324 = vadd.f32 0.0, %v1323
        %1325 = vmatmul.bf16.gmra.mxu0 %v748
        %v1326 = vpop.f32.mrf.mxu0
        %v1327 = vadd.f32 0.0, %v1326
        %v1328 = vpop.f32.mrf.mxu0
        %v1329 = vadd.f32 0.0, %v1328
        %1330 = vmatmul.bf16.gmra.mxu0 %v751
        %v1331 = vpop.f32.mrf.mxu0
        %v1332 = vadd.f32 0.0, %v1331
        %v1333 = vpop.f32.mrf.mxu0
        %v1334 = vadd.f32 0.0, %v1333
        %1335 = vmatmul.bf16.gmra.mxu0 %v754
        %v1336 = vpop.f32.mrf.mxu0
        %v1337 = vadd.f32 0.0, %v1336
        %v1338 = vpop.f32.mrf.mxu0
        %v1339 = vadd.f32 0.0, %v1338
        %1340 = vmatmul.bf16.gmra.mxu0 %v757
        %v1341 = vpop.f32.mrf.mxu0
        %v1342 = vadd.f32 0.0, %v1341
        %v1343 = vpop.f32.mrf.mxu0
        %v1344 = vadd.f32 0.0, %v1343
        %1345 = vmatmul.bf16.gmra.mxu0 %v760
        %v1346 = vpop.f32.mrf.mxu0
        %v1347 = vadd.f32 0.0, %v1346
        %v1348 = vpop.f32.mrf.mxu0
        %v1349 = vadd.f32 0.0, %v1348
        %1350 = vdwg.mxu0
        %1351 = vmatpush.bf16.msra.mxu0 %v434
        %1352 = vmatpush.bf16.msra.mxu0 %v432
        %1353 = vmatpush.bf16.msra.mxu0 %v430
        %1354 = vmatpush.bf16.msra.mxu0 %v428
        %1355 = vmatpush.bf16.msra.mxu0 %v426
        %1356 = vmatpush.bf16.msra.mxu0 %v424
        %1357 = vmatpush.bf16.msra.mxu0 %v422
        %1358 = vmatpush.bf16.msra.mxu0 %v420
        %1359 = vmatmul.bf16.gmra.mxu0 %v692
        %v1360 = vpop.f32.mrf.mxu0
        %v1361 = vadd.f32 %v1232, %v1360
        %v1362 = vpop.f32.mrf.mxu0
        %v1363 = vadd.f32 %v1234, %v1362
        %1364 = vmatmul.bf16.gmra.mxu0 %v695
        %v1365 = vpop.f32.mrf.mxu0
        %v1366 = vadd.f32 %v1237, %v1365
        %v1367 = vpop.f32.mrf.mxu0
        %v1368 = vadd.f32 %v1239, %v1367
        %1369 = vmatmul.bf16.gmra.mxu0 %v698
        %v1370 = vpop.f32.mrf.mxu0
        %v1371 = vadd.f32 %v1242, %v1370
        %v1372 = vpop.f32.mrf.mxu0
        %v1373 = vadd.f32 %v1244, %v1372
        %1374 = vmatmul.bf16.gmra.mxu0 %v701
        %v1375 = vpop.f32.mrf.mxu0
        %v1376 = vadd.f32 %v1247, %v1375
        %v1377 = vpop.f32.mrf.mxu0
        %v1378 = vadd.f32 %v1249, %v1377
        %1379 = vmatmul.bf16.gmra.mxu0 %v704
        %v1380 = vpop.f32.mrf.mxu0
        %v1381 = vadd.f32 %v1252, %v1380
        %v1382 = vpop.f32.mrf.mxu0
        %v1383 = vadd.f32 %v1254, %v1382
        %1384 = vmatmul.bf16.gmra.mxu0 %v707
        %v1385 = vpop.f32.mrf.mxu0
        %v1386 = vadd.f32 %v1257, %v1385
        %v1387 = vpop.f32.mrf.mxu0
        %v1388 = vadd.f32 %v1259, %v1387
        %1389 = vmatmul.bf16.gmra.mxu0 %v710
        %v1390 = vpop.f32.mrf.mxu0
        %v1391 = vadd.f32 %v1262, %v1390
        %v1392 = vpop.f32.mrf.mxu0
        %v1393 = vadd.f32 %v1264, %v1392
        %1394 = vmatmul.bf16.gmra.mxu0 %v713
        %v1395 = vpop.f32.mrf.mxu0
        %v1396 = vadd.f32 %v1267, %v1395
        %v1397 = vpop.f32.mrf.mxu0
        %v1398 = vadd.f32 %v1269, %v1397
        %1399 = vmatmul.bf16.gmra.mxu0 %v716
        %v1400 = vpop.f32.mrf.mxu0
        %v1401 = vadd.f32 %v1272, %v1400
        %v1402 = vpop.f32.mrf.mxu0
        %v1403 = vadd.f32 %v1274, %v1402
        %1404 = vmatmul.bf16.gmra.mxu0 %v719
        %v1405 = vpop.f32.mrf.mxu0
        %v1406 = vadd.f32 %v1277, %v1405
        %v1407 = vpop.f32.mrf.mxu0
        %v1408 = vadd.f32 %v1279, %v1407
        %1409 = vmatmul.bf16.gmra.mxu0 %v722
        %v1410 = vpop.f32.mrf.mxu0
        %v1411 = vadd.f32 %v1282, %v1410
        %v1412 = vpop.f32.mrf.mxu0
        %v1413 = vadd.f32 %v1284, %v1412
        %1414 = vmatmul.bf16.gmra.mxu0 %v725
        %v1415 = vpop.f32.mrf.mxu0
        %v1416 = vadd.f32 %v1287, %v1415
        %v1417 = vpop.f32.mrf.mxu0
        %v1418 = vadd.f32 %v1289, %v1417
        %1419 = vmatmul.bf16.gmra.mxu0 %v728
        %v1420 = vpop.f32.mrf.mxu0
        %v1421 = vadd.f32 %v1292, %v1420
        %v1422 = vpop.f32.mrf.mxu0
        %v1423 = vadd.f32 %v1294, %v1422
        %1424 = vmatmul.bf16.gmra.mxu0 %v731
        %v1425 = vpop.f32.mrf.mxu0
        %v1426 = vadd.f32 %v1297, %v1425
        %v1427 = vpop.f32.mrf.mxu0
        %v1428 = vadd.f32 %v1299, %v1427
        %1429 = vmatmul.bf16.gmra.mxu0 %v734
        %v1430 = vpop.f32.mrf.mxu0
        %v1431 = vadd.f32 %v1302, %v1430
        %v1432 = vpop.f32.mrf.mxu0
        %v1433 = vadd.f32 %v1304, %v1432
        %1434 = vmatmul.bf16.gmra.mxu0 %v737
        %v1435 = vpop.f32.mrf.mxu0
        %v1436 = vadd.f32 %v1307, %v1435
        %v1437 = vpop.f32.mrf.mxu0
        %v1438 = vadd.f32 %v1309, %v1437
        %1439 = vmatmul.bf16.gmra.mxu0 %v740
        %v1440 = vpop.f32.mrf.mxu0
        %v1441 = vadd.f32 %v1312, %v1440
        %v1442 = vpop.f32.mrf.mxu0
        %v1443 = vadd.f32 %v1314, %v1442
        %1444 = vmatmul.bf16.gmra.mxu0 %v743
        %v1445 = vpop.f32.mrf.mxu0
        %v1446 = vadd.f32 %v1317, %v1445
        %v1447 = vpop.f32.mrf.mxu0
        %v1448 = vadd.f32 %v1319, %v1447
        %1449 = vmatmul.bf16.gmra.mxu0 %v746
        %v1450 = vpop.f32.mrf.mxu0
        %v1451 = vadd.f32 %v1322, %v1450
        %v1452 = vpop.f32.mrf.mxu0
        %v1453 = vadd.f32 %v1324, %v1452
        %1454 = vmatmul.bf16.gmra.mxu0 %v749
        %v1455 = vpop.f32.mrf.mxu0
        %v1456 = vadd.f32 %v1327, %v1455
        %v1457 = vpop.f32.mrf.mxu0
        %v1458 = vadd.f32 %v1329, %v1457
        %1459 = vmatmul.bf16.gmra.mxu0 %v752
        %v1460 = vpop.f32.mrf.mxu0
        %v1461 = vadd.f32 %v1332, %v1460
        %v1462 = vpop.f32.mrf.mxu0
        %v1463 = vadd.f32 %v1334, %v1462
        %1464 = vmatmul.bf16.gmra.mxu0 %v755
        %v1465 = vpop.f32.mrf.mxu0
        %v1466 = vadd.f32 %v1337, %v1465
        %v1467 = vpop.f32.mrf.mxu0
        %v1468 = vadd.f32 %v1339, %v1467
        %1469 = vmatmul.bf16.gmra.mxu0 %v758
        %v1470 = vpop.f32.mrf.mxu0
        %v1471 = vadd.f32 %v1342, %v1470
        %v1472 = vpop.f32.mrf.mxu0
        %v1473 = vadd.f32 %v1344, %v1472
        %1474 = vmatmul.bf16.gmra.mxu0 %v761
        %v1475 = vpop.f32.mrf.mxu0
        %v1476 = vadd.f32 %v1347, %v1475
        %v1477 = vpop.f32.mrf.mxu0
        %v1478 = vadd.f32 %v1349, %v1477
        %1479 = vdwg.mxu0
        %1480 = vmatpush.bf16.msra.mxu0 %v450
        %1481 = vmatpush.bf16.msra.mxu0 %v448
        %1482 = vmatpush.bf16.msra.mxu0 %v446
        %1483 = vmatpush.bf16.msra.mxu0 %v444
        %1484 = vmatpush.bf16.msra.mxu0 %v442
        %1485 = vmatpush.bf16.msra.mxu0 %v440
        %1486 = vmatpush.bf16.msra.mxu0 %v438
        %1487 = vmatpush.bf16.msra.mxu0 %v436
        %1488 = vmatmul.bf16.gmra.mxu0 %v693
        %v1489 = vpop.f32.mrf.mxu0
        %v1490 = vadd.f32 %v1361, %v1489
        %v1491 = vpop.f32.mrf.mxu0
        %v1492 = vadd.f32 %v1363, %v1491
        %1493 = vmatmul.bf16.gmra.mxu0 %v696
        %v1494 = vpop.f32.mrf.mxu0
        %v1495 = vadd.f32 %v1366, %v1494
        %v1496 = vpop.f32.mrf.mxu0
        %v1497 = vadd.f32 %v1368, %v1496
        %1498 = vmatmul.bf16.gmra.mxu0 %v699
        %v1499 = vpop.f32.mrf.mxu0
        %v1500 = vadd.f32 %v1371, %v1499
        %v1501 = vpop.f32.mrf.mxu0
        %v1502 = vadd.f32 %v1373, %v1501
        %1503 = vmatmul.bf16.gmra.mxu0 %v702
        %v1504 = vpop.f32.mrf.mxu0
        %v1505 = vadd.f32 %v1376, %v1504
        %v1506 = vpop.f32.mrf.mxu0
        %v1507 = vadd.f32 %v1378, %v1506
        %1508 = vmatmul.bf16.gmra.mxu0 %v705
        %v1509 = vpop.f32.mrf.mxu0
        %v1510 = vadd.f32 %v1381, %v1509
        %v1511 = vpop.f32.mrf.mxu0
        %v1512 = vadd.f32 %v1383, %v1511
        %1513 = vmatmul.bf16.gmra.mxu0 %v708
        %v1514 = vpop.f32.mrf.mxu0
        %v1515 = vadd.f32 %v1386, %v1514
        %v1516 = vpop.f32.mrf.mxu0
        %v1517 = vadd.f32 %v1388, %v1516
        %1518 = vmatmul.bf16.gmra.mxu0 %v711
        %v1519 = vpop.f32.mrf.mxu0
        %v1520 = vadd.f32 %v1391, %v1519
        %v1521 = vpop.f32.mrf.mxu0
        %v1522 = vadd.f32 %v1393, %v1521
        %1523 = vmatmul.bf16.gmra.mxu0 %v714
        %v1524 = vpop.f32.mrf.mxu0
        %v1525 = vadd.f32 %v1396, %v1524
        %v1526 = vpop.f32.mrf.mxu0
        %v1527 = vadd.f32 %v1398, %v1526
        %1528 = vmatmul.bf16.gmra.mxu0 %v717
        %v1529 = vpop.f32.mrf.mxu0
        %v1530 = vadd.f32 %v1401, %v1529
        %v1531 = vpop.f32.mrf.mxu0
        %v1532 = vadd.f32 %v1403, %v1531
        %1533 = vmatmul.bf16.gmra.mxu0 %v720
        %v1534 = vpop.f32.mrf.mxu0
        %v1535 = vadd.f32 %v1406, %v1534
        %v1536 = vpop.f32.mrf.mxu0
        %v1537 = vadd.f32 %v1408, %v1536
        %1538 = vmatmul.bf16.gmra.mxu0 %v723
        %v1539 = vpop.f32.mrf.mxu0
        %v1540 = vadd.f32 %v1411, %v1539
        %v1541 = vpop.f32.mrf.mxu0
        %v1542 = vadd.f32 %v1413, %v1541
        %1543 = vmatmul.bf16.gmra.mxu0 %v726
        %v1544 = vpop.f32.mrf.mxu0
        %v1545 = vadd.f32 %v1416, %v1544
        %v1546 = vpop.f32.mrf.mxu0
        %v1547 = vadd.f32 %v1418, %v1546
        %1548 = vmatmul.bf16.gmra.mxu0 %v729
        %v1549 = vpop.f32.mrf.mxu0
        %v1550 = vadd.f32 %v1421, %v1549
        %v1551 = vpop.f32.mrf.mxu0
        %v1552 = vadd.f32 %v1423, %v1551
        %1553 = vmatmul.bf16.gmra.mxu0 %v732
        %v1554 = vpop.f32.mrf.mxu0
        %v1555 = vadd.f32 %v1426, %v1554
        %v1556 = vpop.f32.mrf.mxu0
        %v1557 = vadd.f32 %v1428, %v1556
        %1558 = vmatmul.bf16.gmra.mxu0 %v735
        %v1559 = vpop.f32.mrf.mxu0
        %v1560 = vadd.f32 %v1431, %v1559
        %v1561 = vpop.f32.mrf.mxu0
        %v1562 = vadd.f32 %v1433, %v1561
        %1563 = vmatmul.bf16.gmra.mxu0 %v738
        %v1564 = vpop.f32.mrf.mxu0
        %v1565 = vadd.f32 %v1436, %v1564
        %v1566 = vpop.f32.mrf.mxu0
        %v1567 = vadd.f32 %v1438, %v1566
        %1568 = vmatmul.bf16.gmra.mxu0 %v741
        %v1569 = vpop.f32.mrf.mxu0
        %v1570 = vadd.f32 %v1441, %v1569
        %v1571 = vpop.f32.mrf.mxu0
        %v1572 = vadd.f32 %v1443, %v1571
        %1573 = vmatmul.bf16.gmra.mxu0 %v744
        %v1574 = vpop.f32.mrf.mxu0
        %v1575 = vadd.f32 %v1446, %v1574
        %v1576 = vpop.f32.mrf.mxu0
        %v1577 = vadd.f32 %v1448, %v1576
        %1578 = vmatmul.bf16.gmra.mxu0 %v747
        %v1579 = vpop.f32.mrf.mxu0
        %v1580 = vadd.f32 %v1451, %v1579
        %v1581 = vpop.f32.mrf.mxu0
        %v1582 = vadd.f32 %v1453, %v1581
        %1583 = vmatmul.bf16.gmra.mxu0 %v750
        %v1584 = vpop.f32.mrf.mxu0
        %v1585 = vadd.f32 %v1456, %v1584
        %v1586 = vpop.f32.mrf.mxu0
        %v1587 = vadd.f32 %v1458, %v1586
        %1588 = vmatmul.bf16.gmra.mxu0 %v753
        %v1589 = vpop.f32.mrf.mxu0
        %v1590 = vadd.f32 %v1461, %v1589
        %v1591 = vpop.f32.mrf.mxu0
        %v1592 = vadd.f32 %v1463, %v1591
        %1593 = vmatmul.bf16.gmra.mxu0 %v756
        %v1594 = vpop.f32.mrf.mxu0
        %v1595 = vadd.f32 %v1466, %v1594
        %v1596 = vpop.f32.mrf.mxu0
        %v1597 = vadd.f32 %v1468, %v1596
        %1598 = vmatmul.bf16.gmra.mxu0 %v759
        %v1599 = vpop.f32.mrf.mxu0
        %v1600 = vadd.f32 %v1471, %v1599
        %v1601 = vpop.f32.mrf.mxu0
        %v1602 = vadd.f32 %v1473, %v1601
        %1603 = vmatmul.bf16.gmra.mxu0 %v762
        %v1604 = vpop.f32.mrf.mxu0
        %v1605 = vadd.f32 %v1476, %v1604
        %v1606 = vpop.f32.mrf.mxu0
        %v1607 = vadd.f32 %v1478, %v1606
        %1608 = vdwg.mxu0
        %v1609 = vmax.f32 %v1103, 0.0
        %v1610 = vmax.f32 %v1490, 0.0
        %v1611 = vmax.f32 %v1105, 0.0
        %v1612 = vmax.f32 %v1492, 0.0
        %v1613 = vmax.f32 %v1108, 0.0
        %v1614 = vmax.f32 %v1495, 0.0
        %v1615 = vmax.f32 %v1110, 0.0
        %v1616 = vmax.f32 %v1497, 0.0
        %v1617 = vmax.f32 %v1113, 0.0
        %v1618 = vmax.f32 %v1500, 0.0
        %v1619 = vmax.f32 %v1115, 0.0
        %v1620 = vmax.f32 %v1502, 0.0
        %v1621 = vmax.f32 %v1118, 0.0
        %v1622 = vmax.f32 %v1505, 0.0
        %v1623 = vmax.f32 %v1120, 0.0
        %v1624 = vmax.f32 %v1507, 0.0
        %v1625 = vmax.f32 %v1123, 0.0
        %v1626 = vmax.f32 %v1510, 0.0
        %v1627 = vmax.f32 %v1125, 0.0
        %v1628 = vmax.f32 %v1512, 0.0
        %v1629 = vmax.f32 %v1128, 0.0
        %v1630 = vmax.f32 %v1515, 0.0
        %v1631 = vmax.f32 %v1130, 0.0
        %v1632 = vmax.f32 %v1517, 0.0
        %v1633 = vmax.f32 %v1133, 0.0
        %v1634 = vmax.f32 %v1520, 0.0
        %v1635 = vmax.f32 %v1135, 0.0
        %v1636 = vmax.f32 %v1522, 0.0
        %v1637 = vmax.f32 %v1138, 0.0
        %v1638 = vmax.f32 %v1525, 0.0
        %v1639 = vmax.f32 %v1140, 0.0
        %v1640 = vmax.f32 %v1527, 0.0
        %v1641 = vmax.f32 %v1143, 0.0
        %v1642 = vmax.f32 %v1530, 0.0
        %v1643 = vmax.f32 %v1145, 0.0
        %v1644 = vmax.f32 %v1532, 0.0
        %v1645 = vmax.f32 %v1148, 0.0
        %v1646 = vmax.f32 %v1535, 0.0
        %v1647 = vmax.f32 %v1150, 0.0
        %v1648 = vmax.f32 %v1537, 0.0
        %v1649 = vmax.f32 %v1153, 0.0
        %v1650 = vmax.f32 %v1540, 0.0
        %v1651 = vmax.f32 %v1155, 0.0
        %v1652 = vmax.f32 %v1542, 0.0
        %v1653 = vmax.f32 %v1158, 0.0
        %v1654 = vmax.f32 %v1545, 0.0
        %v1655 = vmax.f32 %v1160, 0.0
        %v1656 = vmax.f32 %v1547, 0.0
        %v1657 = vmax.f32 %v1163, 0.0
        %v1658 = vmax.f32 %v1550, 0.0
        %v1659 = vmax.f32 %v1165, 0.0
        %v1660 = vmax.f32 %v1552, 0.0
        %v1661 = vmax.f32 %v1168, 0.0
        %v1662 = vmax.f32 %v1555, 0.0
        %v1663 = vmax.f32 %v1170, 0.0
        %v1664 = vmax.f32 %v1557, 0.0
        %v1665 = vmax.f32 %v1173, 0.0
        %v1666 = vmax.f32 %v1560, 0.0
        %v1667 = vmax.f32 %v1175, 0.0
        %v1668 = vmax.f32 %v1562, 0.0
        %v1669 = vmax.f32 %v1178, 0.0
        %v1670 = vmax.f32 %v1565, 0.0
        %v1671 = vmax.f32 %v1180, 0.0
        %v1672 = vmax.f32 %v1567, 0.0
        %v1673 = vmax.f32 %v1183, 0.0
        %v1674 = vmax.f32 %v1570, 0.0
        %v1675 = vmax.f32 %v1185, 0.0
        %v1676 = vmax.f32 %v1572, 0.0
        %v1677 = vmax.f32 %v1188, 0.0
        %v1678 = vmax.f32 %v1575, 0.0
        %v1679 = vmax.f32 %v1190, 0.0
        %v1680 = vmax.f32 %v1577, 0.0
        %v1681 = vmax.f32 %v1193, 0.0
        %v1682 = vmax.f32 %v1580, 0.0
        %v1683 = vmax.f32 %v1195, 0.0
        %v1684 = vmax.f32 %v1582, 0.0
        %v1685 = vmax.f32 %v1198, 0.0
        %v1686 = vmax.f32 %v1585, 0.0
        %v1687 = vmax.f32 %v1200, 0.0
        %v1688 = vmax.f32 %v1587, 0.0
        %v1689 = vmax.f32 %v1203, 0.0
        %v1690 = vmax.f32 %v1590, 0.0
        %v1691 = vmax.f32 %v1205, 0.0
        %v1692 = vmax.f32 %v1592, 0.0
        %v1693 = vmax.f32 %v1208, 0.0
        %v1694 = vmax.f32 %v1595, 0.0
        %v1695 = vmax.f32 %v1210, 0.0
        %v1696 = vmax.f32 %v1597, 0.0
        %v1697 = vmax.f32 %v1213, 0.0
        %v1698 = vmax.f32 %v1600, 0.0
        %v1699 = vmax.f32 %v1215, 0.0
        %v1700 = vmax.f32 %v1602, 0.0
        %v1701 = vmax.f32 %v1218, 0.0
        %v1702 = vmax.f32 %v1605, 0.0
        %v1703 = vmax.f32 %v1220, 0.0
        %v1704 = vmax.f32 %v1607, 0.0
        %v1705 = vmul.f32 %v1609, %v1609
        %v1706 = vmul.f32 %v1611, %v1611
        %v1707 = vmul.f32 %v1613, %v1613
        %v1708 = vmul.f32 %v1615, %v1615
        %v1709 = vmul.f32 %v1617, %v1617
        %v1710 = vmul.f32 %v1619, %v1619
        %v1711 = vmul.f32 %v1621, %v1621
        %v1712 = vmul.f32 %v1623, %v1623
        %v1713 = vmul.f32 %v1625, %v1625
        %v1714 = vmul.f32 %v1627, %v1627
        %v1715 = vmul.f32 %v1629, %v1629
        %v1716 = vmul.f32 %v1631, %v1631
        %v1717 = vmul.f32 %v1633, %v1633
        %v1718 = vmul.f32 %v1635, %v1635
        %v1719 = vmul.f32 %v1637, %v1637
        %v1720 = vmul.f32 %v1639, %v1639
        %v1721 = vmul.f32 %v1641, %v1641
        %v1722 = vmul.f32 %v1643, %v1643
        %v1723 = vmul.f32 %v1645, %v1645
        %v1724 = vmul.f32 %v1647, %v1647
        %v1725 = vmul.f32 %v1649, %v1649
        %v1726 = vmul.f32 %v1651, %v1651
        %v1727 = vmul.f32 %v1653, %v1653
        %v1728 = vmul.f32 %v1655, %v1655
        %v1729 = vmul.f32 %v1657, %v1657
        %v1730 = vmul.f32 %v1659, %v1659
        %v1731 = vmul.f32 %v1661, %v1661
        %v1732 = vmul.f32 %v1663, %v1663
        %v1733 = vmul.f32 %v1665, %v1665
        %v1734 = vmul.f32 %v1667, %v1667
        %v1735 = vmul.f32 %v1669, %v1669
        %v1736 = vmul.f32 %v1671, %v1671
        %v1737 = vmul.f32 %v1673, %v1673
        %v1738 = vmul.f32 %v1675, %v1675
        %v1739 = vmul.f32 %v1677, %v1677
        %v1740 = vmul.f32 %v1679, %v1679
        %v1741 = vmul.f32 %v1681, %v1681
        %v1742 = vmul.f32 %v1683, %v1683
        %v1743 = vmul.f32 %v1685, %v1685
        %v1744 = vmul.f32 %v1687, %v1687
        %v1745 = vmul.f32 %v1689, %v1689
        %v1746 = vmul.f32 %v1691, %v1691
        %v1747 = vmul.f32 %v1693, %v1693
        %v1748 = vmul.f32 %v1695, %v1695
        %v1749 = vmul.f32 %v1697, %v1697
        %v1750 = vmul.f32 %v1699, %v1699
        %v1751 = vmul.f32 %v1701, %v1701
        %v1752 = vmul.f32 %v1703, %v1703
        %v1753 = vadd.f32 %v1609, %v1610
        %v1754 = vadd.f32 %v1611, %v1612
        %v1755 = vadd.f32 %v1613, %v1614
        %v1756 = vadd.f32 %v1615, %v1616
        %v1757 = vadd.f32 %v1617, %v1618
        %v1758 = vadd.f32 %v1619, %v1620
        %v1759 = vadd.f32 %v1621, %v1622
        %v1760 = vadd.f32 %v1623, %v1624
        %v1761 = vadd.f32 %v1625, %v1626
        %v1762 = vadd.f32 %v1627, %v1628
        %v1763 = vadd.f32 %v1629, %v1630
        %v1764 = vadd.f32 %v1631, %v1632
        %v1765 = vadd.f32 %v1633, %v1634
        %v1766 = vadd.f32 %v1635, %v1636
        %v1767 = vadd.f32 %v1637, %v1638
        %v1768 = vadd.f32 %v1639, %v1640
        %v1769 = vadd.f32 %v1641, %v1642
        %v1770 = vadd.f32 %v1643, %v1644
        %v1771 = vadd.f32 %v1645, %v1646
        %v1772 = vadd.f32 %v1647, %v1648
        %v1773 = vadd.f32 %v1649, %v1650
        %v1774 = vadd.f32 %v1651, %v1652
        %v1775 = vadd.f32 %v1653, %v1654
        %v1776 = vadd.f32 %v1655, %v1656
        %v1777 = vadd.f32 %v1657, %v1658
        %v1778 = vadd.f32 %v1659, %v1660
        %v1779 = vadd.f32 %v1661, %v1662
        %v1780 = vadd.f32 %v1663, %v1664
        %v1781 = vadd.f32 %v1665, %v1666
        %v1782 = vadd.f32 %v1667, %v1668
        %v1783 = vadd.f32 %v1669, %v1670
        %v1784 = vadd.f32 %v1671, %v1672
        %v1785 = vadd.f32 %v1673, %v1674
        %v1786 = vadd.f32 %v1675, %v1676
        %v1787 = vadd.f32 %v1677, %v1678
        %v1788 = vadd.f32 %v1679, %v1680
        %v1789 = vadd.f32 %v1681, %v1682
        %v1790 = vadd.f32 %v1683, %v1684
        %v1791 = vadd.f32 %v1685, %v1686
        %v1792 = vadd.f32 %v1687, %v1688
        %v1793 = vadd.f32 %v1689, %v1690
        %v1794 = vadd.f32 %v1691, %v1692
        %v1795 = vadd.f32 %v1693, %v1694
        %v1796 = vadd.f32 %v1695, %v1696
        %v1797 = vadd.f32 %v1697, %v1698
        %v1798 = vadd.f32 %v1699, %v1700
        %v1799 = vadd.f32 %v1701, %v1702
        %v1800 = vadd.f32 %v1703, %v1704
        %v1801 = vmul.f32 %v1610, %v1610
        %v1802 = vmul.f32 %v1612, %v1612
        %v1803 = vmul.f32 %v1614, %v1614
        %v1804 = vmul.f32 %v1616, %v1616
        %v1805 = vmul.f32 %v1618, %v1618
        %v1806 = vmul.f32 %v1620, %v1620
        %v1807 = vmul.f32 %v1622, %v1622
        %v1808 = vmul.f32 %v1624, %v1624
        %v1809 = vmul.f32 %v1626, %v1626
        %v1810 = vmul.f32 %v1628, %v1628
        %v1811 = vmul.f32 %v1630, %v1630
        %v1812 = vmul.f32 %v1632, %v1632
        %v1813 = vmul.f32 %v1634, %v1634
        %v1814 = vmul.f32 %v1636, %v1636
        %v1815 = vmul.f32 %v1638, %v1638
        %v1816 = vmul.f32 %v1640, %v1640
        %v1817 = vmul.f32 %v1642, %v1642
        %v1818 = vmul.f32 %v1644, %v1644
        %v1819 = vmul.f32 %v1646, %v1646
        %v1820 = vmul.f32 %v1648, %v1648
        %v1821 = vmul.f32 %v1650, %v1650
        %v1822 = vmul.f32 %v1652, %v1652
        %v1823 = vmul.f32 %v1654, %v1654
        %v1824 = vmul.f32 %v1656, %v1656
        %v1825 = vmul.f32 %v1658, %v1658
        %v1826 = vmul.f32 %v1660, %v1660
        %v1827 = vmul.f32 %v1662, %v1662
        %v1828 = vmul.f32 %v1664, %v1664
        %v1829 = vmul.f32 %v1666, %v1666
        %v1830 = vmul.f32 %v1668, %v1668
        %v1831 = vmul.f32 %v1670, %v1670
        %v1832 = vmul.f32 %v1672, %v1672
        %v1833 = vmul.f32 %v1674, %v1674
        %v1834 = vmul.f32 %v1676, %v1676
        %v1835 = vmul.f32 %v1678, %v1678
        %v1836 = vmul.f32 %v1680, %v1680
        %v1837 = vmul.f32 %v1682, %v1682
        %v1838 = vmul.f32 %v1684, %v1684
        %v1839 = vmul.f32 %v1686, %v1686
        %v1840 = vmul.f32 %v1688, %v1688
        %v1841 = vmul.f32 %v1690, %v1690
        %v1842 = vmul.f32 %v1692, %v1692
        %v1843 = vmul.f32 %v1694, %v1694
        %v1844 = vmul.f32 %v1696, %v1696
        %v1845 = vmul.f32 %v1698, %v1698
        %v1846 = vmul.f32 %v1700, %v1700
        %v1847 = vmul.f32 %v1702, %v1702
        %v1848 = vmul.f32 %v1704, %v1704
        %v1849 = vadd.f32 %v1705, %v1801
        %v1850 = vadd.f32 %v1706, %v1802
        %v1851 = vadd.f32 %v1707, %v1803
        %v1852 = vadd.f32 %v1708, %v1804
        %v1853 = vadd.f32 %v1709, %v1805
        %v1854 = vadd.f32 %v1710, %v1806
        %v1855 = vadd.f32 %v1711, %v1807
        %v1856 = vadd.f32 %v1712, %v1808
        %v1857 = vadd.f32 %v1713, %v1809
        %v1858 = vadd.f32 %v1714, %v1810
        %v1859 = vadd.f32 %v1715, %v1811
        %v1860 = vadd.f32 %v1716, %v1812
        %v1861 = vadd.f32 %v1717, %v1813
        %v1862 = vadd.f32 %v1718, %v1814
        %v1863 = vadd.f32 %v1719, %v1815
        %v1864 = vadd.f32 %v1720, %v1816
        %v1865 = vadd.f32 %v1721, %v1817
        %v1866 = vadd.f32 %v1722, %v1818
        %v1867 = vadd.f32 %v1723, %v1819
        %v1868 = vadd.f32 %v1724, %v1820
        %v1869 = vadd.f32 %v1725, %v1821
        %v1870 = vadd.f32 %v1726, %v1822
        %v1871 = vadd.f32 %v1727, %v1823
        %v1872 = vadd.f32 %v1728, %v1824
        %v1873 = vadd.f32 %v1729, %v1825
        %v1874 = vadd.f32 %v1730, %v1826
        %v1875 = vadd.f32 %v1731, %v1827
        %v1876 = vadd.f32 %v1732, %v1828
        %v1877 = vadd.f32 %v1733, %v1829
        %v1878 = vadd.f32 %v1734, %v1830
        %v1879 = vadd.f32 %v1735, %v1831
        %v1880 = vadd.f32 %v1736, %v1832
        %v1881 = vadd.f32 %v1737, %v1833
        %v1882 = vadd.f32 %v1738, %v1834
        %v1883 = vadd.f32 %v1739, %v1835
        %v1884 = vadd.f32 %v1740, %v1836
        %v1885 = vadd.f32 %v1741, %v1837
        %v1886 = vadd.f32 %v1742, %v1838
        %v1887 = vadd.f32 %v1743, %v1839
        %v1888 = vadd.f32 %v1744, %v1840
        %v1889 = vadd.f32 %v1745, %v1841
        %v1890 = vadd.f32 %v1746, %v1842
        %v1891 = vadd.f32 %v1747, %v1843
        %v1892 = vadd.f32 %v1748, %v1844
        %v1893 = vadd.f32 %v1749, %v1845
        %v1894 = vadd.f32 %v1750, %v1846
        %v1895 = vadd.f32 %v1751, %v1847
        %v1896 = vadd.f32 %v1752, %v1848
        %p1897 = scmp.eq.s32.totalorder %s27, 0
        // Predicated region
        $region37: #{tpu_custom_call.1} parent=27 // pred_check
          %p1898 = pneg %p1897
        $region38: #{tpu_custom_call.1} parent=27 // pred_check_branch
          %1900 = sbr.rel (%p1898) target = $region40
        $region39: #{tpu_custom_call.1} parent=27 // pred_region
          %1901 = vst [vmem:[%s208] sm:$0xff] 0.0
          %1902 = vst [vmem:[%s208 + $0x8] sm:$0xff] 0.0
          %1903 = vst [vmem:[%s208 + $0x10] sm:$0xff] 0.0
          %1904 = vst [vmem:[%s208 + $0x18] sm:$0xff] 0.0
          %1905 = vst [vmem:[%s208 + $0x20] sm:$0xff] 0.0
          %1906 = vst [vmem:[%s208 + $0x28] sm:$0xff] 0.0
          %1907 = vst [vmem:[%s208 + $0x30] sm:$0xff] 0.0
          %1908 = vst [vmem:[%s208 + $0x38] sm:$0xff] 0.0
          %1909 = vst [vmem:[%s208 + $0x40] sm:$0xff] 0.0
          %1910 = vst [vmem:[%s208 + $0x48] sm:$0xff] 0.0
          %1911 = vst [vmem:[%s208 + $0x50] sm:$0xff] 0.0
          %1912 = vst [vmem:[%s208 + $0x58] sm:$0xff] 0.0
          %1913 = vst [vmem:[%s208 + $0x60] sm:$0xff] 0.0
          %1914 = vst [vmem:[%s208 + $0x68] sm:$0xff] 0.0
          %1915 = vst [vmem:[%s208 + $0x70] sm:$0xff] 0.0
          %1916 = vst [vmem:[%s208 + $0x78] sm:$0xff] 0.0
          %1917 = vst [vmem:[%s208 + $0x80] sm:$0xff] 0.0
          %1918 = vst [vmem:[%s208 + $0x88] sm:$0xff] 0.0
          %1919 = vst [vmem:[%s208 + $0x90] sm:$0xff] 0.0
          %1920 = vst [vmem:[%s208 + $0x98] sm:$0xff] 0.0
          %1921 = vst [vmem:[%s208 + $0xa0] sm:$0xff] 0.0
          %1922 = vst [vmem:[%s208 + $0xa8] sm:$0xff] 0.0
          %1923 = vst [vmem:[%s208 + $0xb0] sm:$0xff] 0.0
          %1924 = vst [vmem:[%s208 + $0xb8] sm:$0xff] 0.0
          %1925 = vst [vmem:[%s208 + $0xc0] sm:$0xff] 0.0
          %1926 = vst [vmem:[%s208 + $0xc8] sm:$0xff] 0.0
          %1927 = vst [vmem:[%s208 + $0xd0] sm:$0xff] 0.0
          %1928 = vst [vmem:[%s208 + $0xd8] sm:$0xff] 0.0
          %1929 = vst [vmem:[%s208 + $0xe0] sm:$0xff] 0.0
          %1930 = vst [vmem:[%s208 + $0xe8] sm:$0xff] 0.0
          %1931 = vst [vmem:[%s208 + $0xf0] sm:$0xff] 0.0
          %1932 = vst [vmem:[%s208 + $0xf8] sm:$0xff] 0.0
          %1933 = vst [vmem:[%s208 + $0x100] sm:$0xff] 0.0
          %1934 = vst [vmem:[%s208 + $0x108] sm:$0xff] 0.0
          %1935 = vst [vmem:[%s208 + $0x110] sm:$0xff] 0.0
          %1936 = vst [vmem:[%s208 + $0x118] sm:$0xff] 0.0
          %1937 = vst [vmem:[%s208 + $0x120] sm:$0xff] 0.0
          %1938 = vst [vmem:[%s208 + $0x128] sm:$0xff] 0.0
          %1939 = vst [vmem:[%s208 + $0x130] sm:$0xff] 0.0
          %1940 = vst [vmem:[%s208 + $0x138] sm:$0xff] 0.0
          %1941 = vst [vmem:[%s208 + $0x140] sm:$0xff] 0.0
          %1942 = vst [vmem:[%s208 + $0x148] sm:$0xff] 0.0
          %1943 = vst [vmem:[%s208 + $0x150] sm:$0xff] 0.0
          %1944 = vst [vmem:[%s208 + $0x158] sm:$0xff] 0.0
          %1945 = vst [vmem:[%s208 + $0x160] sm:$0xff] 0.0
          %1946 = vst [vmem:[%s208 + $0x168] sm:$0xff] 0.0
          %1947 = vst [vmem:[%s208 + $0x170] sm:$0xff] 0.0
          %1948 = vst [vmem:[%s208 + $0x178] sm:$0xff] 0.0
          %1949 = vst [vmem:[%s208 + $0x180] sm:$0xff] 0.0
          %1950 = vst [vmem:[%s208 + $0x188] sm:$0xff] 0.0
          %1951 = vst [vmem:[%s208 + $0x190] sm:$0xff] 0.0
          %1952 = vst [vmem:[%s208 + $0x198] sm:$0xff] 0.0
          %1953 = vst [vmem:[%s208 + $0x1a0] sm:$0xff] 0.0
          %1954 = vst [vmem:[%s208 + $0x1a8] sm:$0xff] 0.0
          %1955 = vst [vmem:[%s208 + $0x1b0] sm:$0xff] 0.0
          %1956 = vst [vmem:[%s208 + $0x1b8] sm:$0xff] 0.0
          %1957 = vst [vmem:[%s208 + $0x1c0] sm:$0xff] 0.0
          %1958 = vst [vmem:[%s208 + $0x1c8] sm:$0xff] 0.0
          %1959 = vst [vmem:[%s208 + $0x1d0] sm:$0xff] 0.0
          %1960 = vst [vmem:[%s208 + $0x1d8] sm:$0xff] 0.0
          %1961 = vst [vmem:[%s208 + $0x1e0] sm:$0xff] 0.0
          %1962 = vst [vmem:[%s208 + $0x1e8] sm:$0xff] 0.0
          %1963 = vst [vmem:[%s208 + $0x1f0] sm:$0xff] 0.0
          %1964 = vst [vmem:[%s208 + $0x1f8] sm:$0xff] 0.0
          %1965 = vst [vmem:[%s208 + $0x200] sm:$0xff] 0.0
          %1966 = vst [vmem:[%s208 + $0x208] sm:$0xff] 0.0
          %1967 = vst [vmem:[%s208 + $0x210] sm:$0xff] 0.0
          %1968 = vst [vmem:[%s208 + $0x218] sm:$0xff] 0.0
          %1969 = vst [vmem:[%s208 + $0x220] sm:$0xff] 0.0
          %1970 = vst [vmem:[%s208 + $0x228] sm:$0xff] 0.0
          %1971 = vst [vmem:[%s208 + $0x230] sm:$0xff] 0.0
          %1972 = vst [vmem:[%s208 + $0x238] sm:$0xff] 0.0
          %1973 = vst [vmem:[%s208 + $0x240] sm:$0xff] 0.0
          %1974 = vst [vmem:[%s208 + $0x248] sm:$0xff] 0.0
          %1975 = vst [vmem:[%s208 + $0x250] sm:$0xff] 0.0
          %1976 = vst [vmem:[%s208 + $0x258] sm:$0xff] 0.0
          %1977 = vst [vmem:[%s208 + $0x260] sm:$0xff] 0.0
          %1978 = vst [vmem:[%s208 + $0x268] sm:$0xff] 0.0
          %1979 = vst [vmem:[%s208 + $0x270] sm:$0xff] 0.0
          %1980 = vst [vmem:[%s208 + $0x278] sm:$0xff] 0.0
          %1981 = vst [vmem:[%s208 + $0x280] sm:$0xff] 0.0
          %1982 = vst [vmem:[%s208 + $0x288] sm:$0xff] 0.0
          %1983 = vst [vmem:[%s208 + $0x290] sm:$0xff] 0.0
          %1984 = vst [vmem:[%s208 + $0x298] sm:$0xff] 0.0
          %1985 = vst [vmem:[%s208 + $0x2a0] sm:$0xff] 0.0
          %1986 = vst [vmem:[%s208 + $0x2a8] sm:$0xff] 0.0
          %1987 = vst [vmem:[%s208 + $0x2b0] sm:$0xff] 0.0
          %1988 = vst [vmem:[%s208 + $0x2b8] sm:$0xff] 0.0
          %1989 = vst [vmem:[%s208 + $0x2c0] sm:$0xff] 0.0
          %1990 = vst [vmem:[%s208 + $0x2c8] sm:$0xff] 0.0
          %1991 = vst [vmem:[%s208 + $0x2d0] sm:$0xff] 0.0
          %1992 = vst [vmem:[%s208 + $0x2d8] sm:$0xff] 0.0
          %1993 = vst [vmem:[%s208 + $0x2e0] sm:$0xff] 0.0
          %1994 = vst [vmem:[%s208 + $0x2e8] sm:$0xff] 0.0
          %1995 = vst [vmem:[%s208 + $0x2f0] sm:$0xff] 0.0
          %1996 = vst [vmem:[%s208 + $0x2f8] sm:$0xff] 0.0
        $region40: #{tpu_custom_call.1} parent=27 // pred_fallthru
          _
        %v1997 = vld [vmem:[%s208] sm:$0xff]
        %v1998 = vld [vmem:[%s208 + $0x10] sm:$0xff]
        %v1999 = vld [vmem:[%s208 + $0x20] sm:$0xff]
        %v2000 = vld [vmem:[%s208 + $0x30] sm:$0xff]
        %v2001 = vld [vmem:[%s208 + $0x40] sm:$0xff]
        %v2002 = vld [vmem:[%s208 + $0x50] sm:$0xff]
        %v2003 = vld [vmem:[%s208 + $0x60] sm:$0xff]
        %v2004 = vld [vmem:[%s208 + $0x70] sm:$0xff]
        %v2005 = vld [vmem:[%s208 + $0x80] sm:$0xff]
        %v2006 = vld [vmem:[%s208 + $0x90] sm:$0xff]
        %v2007 = vld [vmem:[%s208 + $0xa0] sm:$0xff]
        %v2008 = vld [vmem:[%s208 + $0xb0] sm:$0xff]
        %v2009 = vld [vmem:[%s208 + $0xc0] sm:$0xff]
        %v2010 = vld [vmem:[%s208 + $0xd0] sm:$0xff]
        %v2011 = vld [vmem:[%s208 + $0xe0] sm:$0xff]
        %v2012 = vld [vmem:[%s208 + $0xf0] sm:$0xff]
        %v2013 = vld [vmem:[%s208 + $0x100] sm:$0xff]
        %v2014 = vld [vmem:[%s208 + $0x110] sm:$0xff]
        %v2015 = vld [vmem:[%s208 + $0x120] sm:$0xff]
        %v2016 = vld [vmem:[%s208 + $0x130] sm:$0xff]
        %v2017 = vld [vmem:[%s208 + $0x140] sm:$0xff]
        %v2018 = vld [vmem:[%s208 + $0x150] sm:$0xff]
        %v2019 = vld [vmem:[%s208 + $0x160] sm:$0xff]
        %v2020 = vld [vmem:[%s208 + $0x170] sm:$0xff]
        %v2021 = vld [vmem:[%s208 + $0x180] sm:$0xff]
        %v2022 = vld [vmem:[%s208 + $0x190] sm:$0xff]
        %v2023 = vld [vmem:[%s208 + $0x1a0] sm:$0xff]
        %v2024 = vld [vmem:[%s208 + $0x1b0] sm:$0xff]
        %v2025 = vld [vmem:[%s208 + $0x1c0] sm:$0xff]
        %v2026 = vld [vmem:[%s208 + $0x1d0] sm:$0xff]
        %v2027 = vld [vmem:[%s208 + $0x1e0] sm:$0xff]
        %v2028 = vld [vmem:[%s208 + $0x1f0] sm:$0xff]
        %v2029 = vld [vmem:[%s208 + $0x200] sm:$0xff]
        %v2030 = vld [vmem:[%s208 + $0x210] sm:$0xff]
        %v2031 = vld [vmem:[%s208 + $0x220] sm:$0xff]
        %v2032 = vld [vmem:[%s208 + $0x230] sm:$0xff]
        %v2033 = vld [vmem:[%s208 + $0x240] sm:$0xff]
        %v2034 = vld [vmem:[%s208 + $0x250] sm:$0xff]
        %v2035 = vld [vmem:[%s208 + $0x260] sm:$0xff]
        %v2036 = vld [vmem:[%s208 + $0x270] sm:$0xff]
        %v2037 = vld [vmem:[%s208 + $0x280] sm:$0xff]
        %v2038 = vld [vmem:[%s208 + $0x290] sm:$0xff]
        %v2039 = vld [vmem:[%s208 + $0x2a0] sm:$0xff]
        %v2040 = vld [vmem:[%s208 + $0x2b0] sm:$0xff]
        %v2041 = vld [vmem:[%s208 + $0x2c0] sm:$0xff]
        %v2042 = vld [vmem:[%s208 + $0x2d0] sm:$0xff]
        %v2043 = vld [vmem:[%s208 + $0x2e0] sm:$0xff]
        %v2044 = vld [vmem:[%s208 + $0x2f0] sm:$0xff]
        %v2045 = vadd.f32 %v1997, %v1753
        %v2046 = vadd.f32 %v1998, %v1754
        %v2047 = vadd.f32 %v1999, %v1755
        %v2048 = vadd.f32 %v2000, %v1756
        %v2049 = vadd.f32 %v2001, %v1757
        %v2050 = vadd.f32 %v2002, %v1758
        %v2051 = vadd.f32 %v2003, %v1759
        %v2052 = vadd.f32 %v2004, %v1760
        %v2053 = vadd.f32 %v2005, %v1761
        %v2054 = vadd.f32 %v2006, %v1762
        %v2055 = vadd.f32 %v2007, %v1763
        %v2056 = vadd.f32 %v2008, %v1764
        %v2057 = vadd.f32 %v2009, %v1765
        %v2058 = vadd.f32 %v2010, %v1766
        %v2059 = vadd.f32 %v2011, %v1767
        %v2060 = vadd.f32 %v2012, %v1768
        %v2061 = vadd.f32 %v2013, %v1769
        %v2062 = vadd.f32 %v2014, %v1770
        %v2063 = vadd.f32 %v2015, %v1771
        %v2064 = vadd.f32 %v2016, %v1772
        %v2065 = vadd.f32 %v2017, %v1773
        %v2066 = vadd.f32 %v2018, %v1774
        %v2067 = vadd.f32 %v2019, %v1775
        %v2068 = vadd.f32 %v2020, %v1776
        %v2069 = vadd.f32 %v2021, %v1777
        %v2070 = vadd.f32 %v2022, %v1778
        %v2071 = vadd.f32 %v2023, %v1779
        %v2072 = vadd.f32 %v2024, %v1780
        %v2073 = vadd.f32 %v2025, %v1781
        %v2074 = vadd.f32 %v2026, %v1782
        %v2075 = vadd.f32 %v2027, %v1783
        %v2076 = vadd.f32 %v2028, %v1784
        %v2077 = vadd.f32 %v2029, %v1785
        %v2078 = vadd.f32 %v2030, %v1786
        %v2079 = vadd.f32 %v2031, %v1787
        %v2080 = vadd.f32 %v2032, %v1788
        %v2081 = vadd.f32 %v2033, %v1789
        %v2082 = vadd.f32 %v2034, %v1790
        %v2083 = vadd.f32 %v2035, %v1791
        %v2084 = vadd.f32 %v2036, %v1792
        %v2085 = vadd.f32 %v2037, %v1793
        %v2086 = vadd.f32 %v2038, %v1794
        %v2087 = vadd.f32 %v2039, %v1795
        %v2088 = vadd.f32 %v2040, %v1796
        %v2089 = vadd.f32 %v2041, %v1797
        %v2090 = vadd.f32 %v2042, %v1798
        %v2091 = vadd.f32 %v2043, %v1799
        %v2092 = vadd.f32 %v2044, %v1800
        %2093 = vst [vmem:[%s208] sm:$0xff] %v2045
        %2094 = vst [vmem:[%s208 + $0x10] sm:$0xff] %v2046
        %2095 = vst [vmem:[%s208 + $0x20] sm:$0xff] %v2047
        %2096 = vst [vmem:[%s208 + $0x30] sm:$0xff] %v2048
        %2097 = vst [vmem:[%s208 + $0x40] sm:$0xff] %v2049
        %2098 = vst [vmem:[%s208 + $0x50] sm:$0xff] %v2050
        %2099 = vst [vmem:[%s208 + $0x60] sm:$0xff] %v2051
        %2100 = vst [vmem:[%s208 + $0x70] sm:$0xff] %v2052
        %2101 = vst [vmem:[%s208 + $0x80] sm:$0xff] %v2053
        %2102 = vst [vmem:[%s208 + $0x90] sm:$0xff] %v2054
        %2103 = vst [vmem:[%s208 + $0xa0] sm:$0xff] %v2055
        %2104 = vst [vmem:[%s208 + $0xb0] sm:$0xff] %v2056
        %2105 = vst [vmem:[%s208 + $0xc0] sm:$0xff] %v2057
        %2106 = vst [vmem:[%s208 + $0xd0] sm:$0xff] %v2058
        %2107 = vst [vmem:[%s208 + $0xe0] sm:$0xff] %v2059
        %2108 = vst [vmem:[%s208 + $0xf0] sm:$0xff] %v2060
        %2109 = vst [vmem:[%s208 + $0x100] sm:$0xff] %v2061
        %2110 = vst [vmem:[%s208 + $0x110] sm:$0xff] %v2062
        %2111 = vst [vmem:[%s208 + $0x120] sm:$0xff] %v2063
        %2112 = vst [vmem:[%s208 + $0x130] sm:$0xff] %v2064
        %2113 = vst [vmem:[%s208 + $0x140] sm:$0xff] %v2065
        %2114 = vst [vmem:[%s208 + $0x150] sm:$0xff] %v2066
        %2115 = vst [vmem:[%s208 + $0x160] sm:$0xff] %v2067
        %2116 = vst [vmem:[%s208 + $0x170] sm:$0xff] %v2068
        %2117 = vst [vmem:[%s208 + $0x180] sm:$0xff] %v2069
        %2118 = vst [vmem:[%s208 + $0x190] sm:$0xff] %v2070
        %2119 = vst [vmem:[%s208 + $0x1a0] sm:$0xff] %v2071
        %2120 = vst [vmem:[%s208 + $0x1b0] sm:$0xff] %v2072
        %2121 = vst [vmem:[%s208 + $0x1c0] sm:$0xff] %v2073
        %2122 = vst [vmem:[%s208 + $0x1d0] sm:$0xff] %v2074
        %2123 = vst [vmem:[%s208 + $0x1e0] sm:$0xff] %v2075
        %2124 = vst [vmem:[%s208 + $0x1f0] sm:$0xff] %v2076
        %2125 = vst [vmem:[%s208 + $0x200] sm:$0xff] %v2077
        %2126 = vst [vmem:[%s208 + $0x210] sm:$0xff] %v2078
        %2127 = vst [vmem:[%s208 + $0x220] sm:$0xff] %v2079
        %2128 = vst [vmem:[%s208 + $0x230] sm:$0xff] %v2080
        %2129 = vst [vmem:[%s208 + $0x240] sm:$0xff] %v2081
        %2130 = vst [vmem:[%s208 + $0x250] sm:$0xff] %v2082
        %2131 = vst [vmem:[%s208 + $0x260] sm:$0xff] %v2083
        %2132 = vst [vmem:[%s208 + $0x270] sm:$0xff] %v2084
        %2133 = vst [vmem:[%s208 + $0x280] sm:$0xff] %v2085
        %2134 = vst [vmem:[%s208 + $0x290] sm:$0xff] %v2086
        %2135 = vst [vmem:[%s208 + $0x2a0] sm:$0xff] %v2087
        %2136 = vst [vmem:[%s208 + $0x2b0] sm:$0xff] %v2088
        %2137 = vst [vmem:[%s208 + $0x2c0] sm:$0xff] %v2089
        %2138 = vst [vmem:[%s208 + $0x2d0] sm:$0xff] %v2090
        %2139 = vst [vmem:[%s208 + $0x2e0] sm:$0xff] %v2091
        %2140 = vst [vmem:[%s208 + $0x2f0] sm:$0xff] %v2092
        %v2141 = vld [vmem:[%s208 + $0x8] sm:$0xff]
        %v2142 = vld [vmem:[%s208 + $0x18] sm:$0xff]
        %v2143 = vld [vmem:[%s208 + $0x28] sm:$0xff]
        %v2144 = vld [vmem:[%s208 + $0x38] sm:$0xff]
        %v2145 = vld [vmem:[%s208 + $0x48] sm:$0xff]
        %v2146 = vld [vmem:[%s208 + $0x58] sm:$0xff]
        %v2147 = vld [vmem:[%s208 + $0x68] sm:$0xff]
        %v2148 = vld [vmem:[%s208 + $0x78] sm:$0xff]
        %v2149 = vld [vmem:[%s208 + $0x88] sm:$0xff]
        %v2150 = vld [vmem:[%s208 + $0x98] sm:$0xff]
        %v2151 = vld [vmem:[%s208 + $0xa8] sm:$0xff]
        %v2152 = vld [vmem:[%s208 + $0xb8] sm:$0xff]
        %v2153 = vld [vmem:[%s208 + $0xc8] sm:$0xff]
        %v2154 = vld [vmem:[%s208 + $0xd8] sm:$0xff]
        %v2155 = vld [vmem:[%s208 + $0xe8] sm:$0xff]
        %v2156 = vld [vmem:[%s208 + $0xf8] sm:$0xff]
        %v2157 = vld [vmem:[%s208 + $0x108] sm:$0xff]
        %v2158 = vld [vmem:[%s208 + $0x118] sm:$0xff]
        %v2159 = vld [vmem:[%s208 + $0x128] sm:$0xff]
        %v2160 = vld [vmem:[%s208 + $0x138] sm:$0xff]
        %v2161 = vld [vmem:[%s208 + $0x148] sm:$0xff]
        %v2162 = vld [vmem:[%s208 + $0x158] sm:$0xff]
        %v2163 = vld [vmem:[%s208 + $0x168] sm:$0xff]
        %v2164 = vld [vmem:[%s208 + $0x178] sm:$0xff]
        %v2165 = vld [vmem:[%s208 + $0x188] sm:$0xff]
        %v2166 = vld [vmem:[%s208 + $0x198] sm:$0xff]
        %v2167 = vld [vmem:[%s208 + $0x1a8] sm:$0xff]
        %v2168 = vld [vmem:[%s208 + $0x1b8] sm:$0xff]
        %v2169 = vld [vmem:[%s208 + $0x1c8] sm:$0xff]
        %v2170 = vld [vmem:[%s208 + $0x1d8] sm:$0xff]
        %v2171 = vld [vmem:[%s208 + $0x1e8] sm:$0xff]
        %v2172 = vld [vmem:[%s208 + $0x1f8] sm:$0xff]
        %v2173 = vld [vmem:[%s208 + $0x208] sm:$0xff]
        %v2174 = vld [vmem:[%s208 + $0x218] sm:$0xff]
        %v2175 = vld [vmem:[%s208 + $0x228] sm:$0xff]
        %v2176 = vld [vmem:[%s208 + $0x238] sm:$0xff]
        %v2177 = vld [vmem:[%s208 + $0x248] sm:$0xff]
        %v2178 = vld [vmem:[%s208 + $0x258] sm:$0xff]
        %v2179 = vld [vmem:[%s208 + $0x268] sm:$0xff]
        %v2180 = vld [vmem:[%s208 + $0x278] sm:$0xff]
        %v2181 = vld [vmem:[%s208 + $0x288] sm:$0xff]
        %v2182 = vld [vmem:[%s208 + $0x298] sm:$0xff]
        %v2183 = vld [vmem:[%s208 + $0x2a8] sm:$0xff]
        %v2184 = vld [vmem:[%s208 + $0x2b8] sm:$0xff]
        %v2185 = vld [vmem:[%s208 + $0x2c8] sm:$0xff]
        %v2186 = vld [vmem:[%s208 + $0x2d8] sm:$0xff]
        %v2187 = vld [vmem:[%s208 + $0x2e8] sm:$0xff]
        %v2188 = vld [vmem:[%s208 + $0x2f8] sm:$0xff]
        %v2189 = vadd.f32 %v2141, %v1849
        %v2190 = vadd.f32 %v2142, %v1850
        %v2191 = vadd.f32 %v2143, %v1851
        %v2192 = vadd.f32 %v2144, %v1852
        %v2193 = vadd.f32 %v2145, %v1853
        %v2194 = vadd.f32 %v2146, %v1854
        %v2195 = vadd.f32 %v2147, %v1855
        %v2196 = vadd.f32 %v2148, %v1856
        %v2197 = vadd.f32 %v2149, %v1857
        %v2198 = vadd.f32 %v2150, %v1858
        %v2199 = vadd.f32 %v2151, %v1859
        %v2200 = vadd.f32 %v2152, %v1860
        %v2201 = vadd.f32 %v2153, %v1861
        %v2202 = vadd.f32 %v2154, %v1862
        %v2203 = vadd.f32 %v2155, %v1863
        %v2204 = vadd.f32 %v2156, %v1864
        %v2205 = vadd.f32 %v2157, %v1865
        %v2206 = vadd.f32 %v2158, %v1866
        %v2207 = vadd.f32 %v2159, %v1867
        %v2208 = vadd.f32 %v2160, %v1868
        %v2209 = vadd.f32 %v2161, %v1869
        %v2210 = vadd.f32 %v2162, %v1870
        %v2211 = vadd.f32 %v2163, %v1871
        %v2212 = vadd.f32 %v2164, %v1872
        %v2213 = vadd.f32 %v2165, %v1873
        %v2214 = vadd.f32 %v2166, %v1874
        %v2215 = vadd.f32 %v2167, %v1875
        %v2216 = vadd.f32 %v2168, %v1876
        %v2217 = vadd.f32 %v2169, %v1877
        %v2218 = vadd.f32 %v2170, %v1878
        %v2219 = vadd.f32 %v2171, %v1879
        %v2220 = vadd.f32 %v2172, %v1880
        %v2221 = vadd.f32 %v2173, %v1881
        %v2222 = vadd.f32 %v2174, %v1882
        %v2223 = vadd.f32 %v2175, %v1883
        %v2224 = vadd.f32 %v2176, %v1884
        %v2225 = vadd.f32 %v2177, %v1885
        %v2226 = vadd.f32 %v2178, %v1886
        %v2227 = vadd.f32 %v2179, %v1887
        %v2228 = vadd.f32 %v2180, %v1888
        %v2229 = vadd.f32 %v2181, %v1889
        %v2230 = vadd.f32 %v2182, %v1890
        %v2231 = vadd.f32 %v2183, %v1891
        %v2232 = vadd.f32 %v2184, %v1892
        %v2233 = vadd.f32 %v2185, %v1893
        %v2234 = vadd.f32 %v2186, %v1894
        %v2235 = vadd.f32 %v2187, %v1895
        %v2236 = vadd.f32 %v2188, %v1896
        %2237 = vst [vmem:[%s208 + $0x8] sm:$0xff] %v2189
        %2238 = vst [vmem:[%s208 + $0x18] sm:$0xff] %v2190
        %2239 = vst [vmem:[%s208 + $0x28] sm:$0xff] %v2191
        %2240 = vst [vmem:[%s208 + $0x38] sm:$0xff] %v2192
        %2241 = vst [vmem:[%s208 + $0x48] sm:$0xff] %v2193
        %2242 = vst [vmem:[%s208 + $0x58] sm:$0xff] %v2194
        %2243 = vst [vmem:[%s208 + $0x68] sm:$0xff] %v2195
        %2244 = vst [vmem:[%s208 + $0x78] sm:$0xff] %v2196
        %2245 = vst [vmem:[%s208 + $0x88] sm:$0xff] %v2197
        %2246 = vst [vmem:[%s208 + $0x98] sm:$0xff] %v2198
        %2247 = vst [vmem:[%s208 + $0xa8] sm:$0xff] %v2199
        %2248 = vst [vmem:[%s208 + $0xb8] sm:$0xff] %v2200
        %2249 = vst [vmem:[%s208 + $0xc8] sm:$0xff] %v2201
        %2250 = vst [vmem:[%s208 + $0xd8] sm:$0xff] %v2202
        %2251 = vst [vmem:[%s208 + $0xe8] sm:$0xff] %v2203
        %2252 = vst [vmem:[%s208 + $0xf8] sm:$0xff] %v2204
        %2253 = vst [vmem:[%s208 + $0x108] sm:$0xff] %v2205
        %2254 = vst [vmem:[%s208 + $0x118] sm:$0xff] %v2206
        %2255 = vst [vmem:[%s208 + $0x128] sm:$0xff] %v2207
        %2256 = vst [vmem:[%s208 + $0x138] sm:$0xff] %v2208
        %2257 = vst [vmem:[%s208 + $0x148] sm:$0xff] %v2209
        %2258 = vst [vmem:[%s208 + $0x158] sm:$0xff] %v2210
        %2259 = vst [vmem:[%s208 + $0x168] sm:$0xff] %v2211
        %2260 = vst [vmem:[%s208 + $0x178] sm:$0xff] %v2212
        %2261 = vst [vmem:[%s208 + $0x188] sm:$0xff] %v2213
        %2262 = vst [vmem:[%s208 + $0x198] sm:$0xff] %v2214
        %2263 = vst [vmem:[%s208 + $0x1a8] sm:$0xff] %v2215
        %2264 = vst [vmem:[%s208 + $0x1b8] sm:$0xff] %v2216
        %2265 = vst [vmem:[%s208 + $0x1c8] sm:$0xff] %v2217
        %2266 = vst [vmem:[%s208 + $0x1d8] sm:$0xff] %v2218
        %2267 = vst [vmem:[%s208 + $0x1e8] sm:$0xff] %v2219
        %2268 = vst [vmem:[%s208 + $0x1f8] sm:$0xff] %v2220
        %2269 = vst [vmem:[%s208 + $0x208] sm:$0xff] %v2221
        %2270 = vst [vmem:[%s208 + $0x218] sm:$0xff] %v2222
        %2271 = vst [vmem:[%s208 + $0x228] sm:$0xff] %v2223
        %2272 = vst [vmem:[%s208 + $0x238] sm:$0xff] %v2224
        %2273 = vst [vmem:[%s208 + $0x248] sm:$0xff] %v2225
        %2274 = vst [vmem:[%s208 + $0x258] sm:$0xff] %v2226
        %2275 = vst [vmem:[%s208 + $0x268] sm:$0xff] %v2227
        %2276 = vst [vmem:[%s208 + $0x278] sm:$0xff] %v2228
        %2277 = vst [vmem:[%s208 + $0x288] sm:$0xff] %v2229
        %2278 = vst [vmem:[%s208 + $0x298] sm:$0xff] %v2230
        %2279 = vst [vmem:[%s208 + $0x2a8] sm:$0xff] %v2231
        %2280 = vst [vmem:[%s208 + $0x2b8] sm:$0xff] %v2232
        %2281 = vst [vmem:[%s208 + $0x2c8] sm:$0xff] %v2233
        %2282 = vst [vmem:[%s208 + $0x2d8] sm:$0xff] %v2234
        %2283 = vst [vmem:[%s208 + $0x2e8] sm:$0xff] %v2235
        %2284 = vst [vmem:[%s208 + $0x2f8] sm:$0xff] %v2236
        %s2285 = sand.u32 %s100, 1
        %s2286 = scalar_lea.sflag [#allocation4], %s2285
        %s2287 = sand.u32 %s100, 1
        %s2288 = smul.addr %s2287, 768
        %s2289 = scalar_lea.vmem [#allocation7], %s2288
        // Predicated region
        $region41: #{tpu_custom_call.1} parent=27 // pred_check
          %p2290 = pneg %p110
        $region42: #{tpu_custom_call.1} parent=27 // pred_check_branch
          %2292 = sbr.rel (%p2290) target = $region44
        $region43: #{tpu_custom_call.1} parent=27 // pred_region
          %2294 = vsyncadd %s2286, 0
          %s2295 = smul.addr %s26, 96
          %s2296 = smul.addr %s25, 96
          %s2297 = sadd.s32 %s2295, %s2296
          %s2298 = smul.addr %s2297, 8
          %s2299 = scalar_lea.hbm %s2, %s2298
          %s2300 = sshll.u32 %s2289, 4
          %s2301 = int_to_ptr.vmem [resolvable:$true] %s2300
          %s2302 = sshll.u32 %s2299, 4
          %s2303 = int_to_ptr.hbm [resolvable:$true] %s2302
          %2308 = dma.vmem_to_hbm [thread:$0]  %s2301, 12288, %s2303, %s2286, 256, 256, 16
        $region44: #{tpu_custom_call.1} parent=27 // pred_fallthru
          _
      $region28: #{tpu_custom_call.1} parent=5 // pred_fallthru
        _
      %p2309 = scmp.le.s32.totalorder 2, %s15
      // Predicated region
      $region45: #{tpu_custom_call.1} parent=5 // pred_check
        %p2310 = pneg %p2309
      $region46: #{tpu_custom_call.1} parent=5 // pred_check_branch
        %2312 = sbr.rel (%p2310) target = $region48
      $region47: #{tpu_custom_call.1} parent=5 // pred_region
        %s2313 = ssub.s32 %s15, 2
        // Predicated region
        $region49: #{tpu_custom_call.1} parent=47 // pred_check
          %p2314 = pneg %p116
        $region50: #{tpu_custom_call.1} parent=47 // pred_check_branch
          %2316 = sbr.rel (%p2314) target = $region52
        $region51: #{tpu_custom_call.1} parent=47 // pred_region
          %s2317 = sand.u32 %s101, 1
          %s2318 = scalar_lea.sflag [#allocation4], %s2317
          %s2319 = sand.u32 %s101, 1
          %s2320 = smul.addr %s2319, 768
          %s2321 = scalar_lea.vmem [#allocation7], %s2320
          %2323 = dma.done %s2318, 12288
        $region52: #{tpu_custom_call.1} parent=47 // pred_fallthru
          _
      $region48: #{tpu_custom_call.1} parent=5 // pred_fallthru
        _
    $region6: #{tpu_custom_call.1} parent=1 // loop_footer
      %s19 = sadd.s32 1, %s15
    $region7: #{tpu_custom_call.1} parent=1 // loop_footer_branch
      %14 = sbr.rel target = $region3
    $region8: #{tpu_custom_call.1} parent=1 // loop_exit
      _
    %2324 = vsyncpa [#allocation3], 1
    %s2325 = scalar_lea.sflag [#allocation3], 1
    %2326 = vsyncpa %s2325, 1
    %2327 = vsyncpa [#allocation6], 1
    %2328 = vsyncpa [#allocation4], 1
    %s2329 = scalar_lea.sflag [#allocation4], 1
    %2330 = vsyncpa %s2329, 1

</llo_original>
